<compile_context>
chip_gen: v7x
topology: tpu7x:2x2x1
jax: 0.10.0
libtpu: 0.0.40
codegen_flags: <defaults>
</compile_context>

<pallas_src>
import functools

import jax
import jax.numpy as jnp
from jax.experimental import pallas as pl
from jax.experimental.pallas import tpu as pltpu

EPS = 1e-5  # PyTorch BatchNorm2d default


# --------------------------------------------------------------------------- #
# Banded conv weights.
#   conv(x)[h, w*Cout + co] = sum_ky  x_rows[h + ky - 1, :] @ band[ky]
# where x_rows is the lane-dense (H, W*Cin) image (zero for out-of-range rows)
# and band[ky][(w+dx-1)*Cin + ci, w*Cout + co] = w_hwio[ky, dx, ci, co]
# (rows for dx outside the image are simply absent -> W-boundary zero pad).
# --------------------------------------------------------------------------- #
def _band_weights(w_hwio, W):
    Kh, Kw, Cin, Cout = w_hwio.shape                     # (3, 3, Cin, Cout)
    j = jnp.arange(W)[None, :, None]                     # input (interior) col
    q = jnp.arange(W)[None, None, :]                     # output col
    d = jnp.arange(Kw)[:, None, None]                    # dx
    sel = (j == q + d - 1).astype(w_hwio.dtype)          # (Kw, W, W)
    band = jnp.einsum("djw,ydio->yjiwo", sel, w_hwio)    # (Kh, W, Cin, W, Cout)
    return band.reshape(Kh, W * Cin, W * Cout)


# --------------------------------------------------------------------------- #
# Kernels
# --------------------------------------------------------------------------- #
def _conv1_kernel(x_ref, wb_ref, out_ref, st_ref, xpad, *, H, W, Cin, Cout):
    """3x3 SAME conv (bias-free) of one image + per-image channel stats.

    x_ref  : (1, H, W*Cin) f32        lane-dense NHWC image
    wb_ref : (3, W*Cin, W*Cout) bf16  banded weights
    out_ref: (1, H, W*Cout) bf16      raw conv output, lane-dense
    st_ref : (1, 2, W*Cout) f32       [sum, sum(x^2)] over H (wrapper sums W, N)
    xpad   : (H+2, W*Cin) f32 scratch row-halo only (W halo is in the weights)
    """
    WI, WC = W * Cin, W * Cout
    # Re-zero the two halo rows every step (cheap; safe if the batch axis is
    # split across TensorCores).
    xpad[0:1, :] = jnp.zeros((1, WI), jnp.float32)
    xpad[H + 1:H + 2, :] = jnp.zeros((1, WI), jnp.float32)
    xpad[1:H + 1, :] = x_ref[0]

    acc = None
    for ky in range(3):
        lhs = xpad[ky:ky + H, :].astype(jnp.bfloat16)
        part = jnp.dot(lhs, wb_ref[ky], preferred_element_type=jnp.float32)
        acc = part if acc is None else acc + part

    ps = jnp.sum(acc, axis=0, keepdims=True)
    pss = jnp.sum(acc * acc, axis=0, keepdims=True)
    st_ref[...] = jnp.concatenate([ps, pss], axis=0).reshape(1, 2, WC)
    out_ref[...] = acc.reshape(1, H, WC).astype(out_ref.dtype)


def _bn_relu_conv2_kernel(c1_ref, sc_ref, sh_ref, wb_ref, out_ref, st_ref, ypad,
                          *, H, W, C):
    """BN1 (pre-folded affine) + ReLU + 3x3 conv2 + stage-2 stats.

    c1_ref : (1, H, W*C) bf16   raw conv1 output (lane-dense)
    sc_ref : (1, W*C) f32       BN1 scale (lane-dense, pre-tiled in wrapper)
    sh_ref : (1, W*C) f32       BN1 shift
    wb_ref : (3, W*C, W*C) bf16 banded conv2 weights
    out_ref: (1, H, W*C) bf16   raw conv2 output
    st_ref : (1, 2, W*C) f32    per-image [sum, sumsq] partials
    ypad   : (H+2, W*C) f32     row-halo scratch for the BN1+ReLU activations
    """
    WC = W * C
    ypad[0:1, :] = jnp.zeros((1, WC), jnp.float32)
    ypad[H + 1:H + 2, :] = jnp.zeros((1, WC), jnp.float32)
    y = jnp.maximum(c1_ref[0].astype(jnp.float32) * sc_ref[...] + sh_ref[...], 0.0)
    ypad[1:H + 1, :] = y

    acc = None
    for ky in range(3):
        lhs = ypad[ky:ky + H, :].astype(jnp.bfloat16)
        part = jnp.dot(lhs, wb_ref[ky], preferred_element_type=jnp.float32)
        acc = part if acc is None else acc + part

    ps = jnp.sum(acc, axis=0, keepdims=True)
    pss = jnp.sum(acc * acc, axis=0, keepdims=True)
    st_ref[...] = jnp.concatenate([ps, pss], axis=0).reshape(1, 2, WC)
    out_ref[...] = acc.reshape(1, H, WC).astype(out_ref.dtype)


def _bn_relu_kernel(c2_ref, sc_ref, sh_ref, out_ref):
    """Final BN2 + ReLU, fully lane-dense elementwise (f32 output)."""
    out_ref[...] = jnp.maximum(
        c2_ref[...].astype(jnp.float32) * sc_ref[...] + sh_ref[...], 0.0)


# --------------------------------------------------------------------------- #
# Wrapper
# --------------------------------------------------------------------------- #
def _fold_bn_affine(stats, gamma, beta, W, C, count):
    """Per-image lane-dense [sum, sumsq] partials -> lane-dense (1, W*C) affine."""
    s = stats.reshape(stats.shape[0], 2, W, C).sum(axis=(0, 2))   # (2, C)
    mean = s[0] / count
    var = s[1] / count - mean * mean           # biased (train-mode) variance
    scale = gamma.reshape(-1) * jax.lax.rsqrt(var + EPS)
    shift = beta.reshape(-1) - mean * scale
    scale_d = jnp.tile(scale, (W,)).reshape(1, W * C)
    shift_d = jnp.tile(shift, (W,)).reshape(1, W * C)
    return scale_d.astype(jnp.float32), shift_d.astype(jnp.float32)


def conv_block_pallas(x_nchw, params):
    """x_nchw: (N, Cin, H, W) f32 -> (N, Cout, H, W) f32. PyTorch train-mode BN."""
    w1, b1, g1, be1, w2, b2, g2, be2 = params
    # Per-channel conv biases are exactly cancelled by train-mode BN's
    # batch-mean subtraction (the reference keeps them and still matches).
    del b1, b2
    N, Cin, H, W = x_nchw.shape
    Cout = w1.shape[-1]
    WC = W * Cout
    count = float(N * H * W)

    # NCHW -> lane-dense (N, H, W*Cin); no HBM-materialized zero pad.
    x2d = jnp.transpose(x_nchw, (0, 2, 3, 1)).reshape(N, H, W * Cin)
    wb1 = _band_weights(w1, W).astype(jnp.bfloat16)      # (3, W*Cin,  W*Cout)
    wb2 = _band_weights(w2, W).astype(jnp.bfloat16)      # (3, W*Cout, W*Cout)

    parallel = pltpu.CompilerParams(dimension_semantics=("parallel",))

    # ---- pass 1: conv1 (bf16 out) + per-image stats --------------------------
    c1, s1 = pl.pallas_call(
        functools.partial(_conv1_kernel, H=H, W=W, Cin=Cin, Cout=Cout),
        grid=(N,),
        in_specs=[
            pl.BlockSpec((1, H, W * Cin), lambda n: (n, 0, 0)),
            pl.BlockSpec((3, W * Cin, WC), lambda n: (0, 0, 0)),
        ],
        out_specs=(
            pl.BlockSpec((1, H, WC), lambda n: (n, 0, 0)),
            pl.BlockSpec((1, 2, WC), lambda n: (n, 0, 0)),
        ),
        out_shape=(
            jax.ShapeDtypeStruct((N, H, WC), jnp.bfloat16),
            jax.ShapeDtypeStruct((N, 2, WC), jnp.float32),
        ),
        scratch_shapes=[pltpu.VMEM((H + 2, W * Cin), jnp.float32)],
        compiler_params=parallel,
    )(x2d, wb1)

    # BN1 folded affine: computed once in plain JAX, not per grid step.
    sc1, sh1 = _fold_bn_affine(s1, g1, be1, W, Cout, count)

    # ---- pass 2: BN1 + ReLU + conv2 (bf16 out) + stats -----------------------
    c2, s2 = pl.pallas_call(
        functools.partial(_bn_relu_conv2_kernel, H=H, W=W, C=Cout),
        grid=(N,),
        in_specs=[
            pl.BlockSpec((1, H, WC), lambda n: (n, 0, 0)),
            pl.BlockSpec((1, WC), lambda n: (0, 0)),
            pl.BlockSpec((1, WC), lambda n: (0, 0)),
            pl.BlockSpec((3, WC, WC), lambda n: (0, 0, 0)),
        ],
        out_specs=(
            pl.BlockSpec((1, H, WC), lambda n: (n, 0, 0)),
            pl.BlockSpec((1, 2, WC), lambda n: (n, 0, 0)),
        ),
        out_shape=(
            jax.ShapeDtypeStruct((N, H, WC), jnp.bfloat16),
            jax.ShapeDtypeStruct((N, 2, WC), jnp.float32),
        ),
        scratch_shapes=[pltpu.VMEM((H + 2, WC), jnp.float32)],
        compiler_params=parallel,
    )(c1, sc1, sh1, wb2)

    sc2, sh2 = _fold_bn_affine(s2, g2, be2, W, Cout, count)

    # ---- pass 3: BN2 + ReLU (f32 out) -----------------------------------------
    out_d = pl.pallas_call(
        _bn_relu_kernel,
        grid=(N,),
        in_specs=[
            pl.BlockSpec((1, H, WC), lambda n: (n, 0, 0)),
            pl.BlockSpec((1, WC), lambda n: (0, 0)),
            pl.BlockSpec((1, WC), lambda n: (0, 0)),
        ],
        out_specs=pl.BlockSpec((1, H, WC), lambda n: (n, 0, 0)),
        out_shape=jax.ShapeDtypeStruct((N, H, WC), jnp.float32),
        compiler_params=parallel,
    )(c2, sc2, sh2)

    out_nhwc = out_d.reshape(N, H, W, Cout)
    return jnp.transpose(out_nhwc, (0, 3, 1, 2))   # back to NCHW (PyTorch parity)


# --------------------------------------------------------------------------- #
# Plain-JAX reference (PyTorch train-mode semantics, biases included, all f32)
# --------------------------------------------------------------------------- #
def conv_block_ref(x_nchw, params):
    w1, b1, g1, be1, w2, b2, g2, be2 = params
    x = jnp.transpose(x_nchw, (0, 2, 3, 1))  # NHWC
    dn = jax.lax.conv_dimension_numbers(x.shape, w1.shape, ("NHWC", "HWIO", "NHWC"))

    def stage(x, w, b, g, be):
        y = jax.lax.conv_general_dilated(x, w, (1, 1), "SAME", dimension_numbers=dn)
        y = y + b.reshape(1, 1, 1, -1)
        m = jnp.mean(y, axis=(0, 1, 2), keepdims=True)
        v = jnp.mean((y - m) ** 2, axis=(0, 1, 2), keepdims=True)  # biased var
        y = (y - m) * jax.lax.rsqrt(v + EPS) * g.reshape(1, 1, 1, -1) + be.reshape(1, 1, 1, -1)
        return jnp.maximum(y, 0.0)

    y = stage(x, w1, b1, g1, be1)
    y = stage(y, w2, b2, g2, be2)
    return jnp.transpose(y, (0, 3, 1, 2))


def init_params(key, in_c, out_c):
    k1, k2, k3, k4 = jax.random.split(key, 4)
    # Conv weights stored as HWIO = (3, 3, Cin, Cout); BN gamma=1, beta=0.
    w1 = jax.random.normal(k1, (3, 3, in_c, out_c), jnp.float32) * 0.1
    b1 = jax.random.normal(k2, (1, out_c), jnp.float32) * 0.1
    w2 = jax.random.normal(k3, (3, 3, out_c, out_c), jnp.float32) * 0.1
    b2 = jax.random.normal(k4, (1, out_c), jnp.float32) * 0.1
    g1 = jnp.ones((1, out_c), jnp.float32)
    be1 = jnp.zeros((1, out_c), jnp.float32)
    g2 = jnp.ones((1, out_c), jnp.float32)
    be2 = jnp.zeros((1, out_c), jnp.float32)
    return (w1, b1, g1, be1, w2, b2, g2, be2)


if __name__ == "__main__":
    key = jax.random.PRNGKey(0)
    kx, kp = jax.random.split(key)

    # Small demo shape; W*Cout = 16*8 = 128 -> exactly lane-dense.
    N, Cin, Cout, H, W = 2, 3, 8, 16, 16
    x = jax.random.normal(kx, (N, Cin, H, W), jnp.float32)   # NCHW like PyTorch
    params = init_params(kp, Cin, Cout)

    out = jax.block_until_ready(jax.jit(conv_block_pallas)(x, params))
    ref = jax.block_until_ready(conv_block_ref(x, params))

    assert out.shape == (N, Cout, H, W)
    # 5e-2 tolerance: bf16 inter-pass activations / MXU operands (~2^-9 relative
    # per rounding) amplified by BN normalization and conv accumulation; the
    # reference is pure f32.
    if not jnp.allclose(out, ref, rtol=5e-2, atol=5e-2):
        err = float(jnp.max(jnp.abs(out - ref)))
        raise AssertionError(f"Pallas output mismatch vs reference (max abs err {err})")

    print("KERNEL_OK")
</pallas_src>

<mosaic_0001>
module attributes {stable_mosaic.version = 11 : i64} {
  func.func @_conv1_kernel(%arg0: i32, %arg1: memref<1x16x48xf32, #tpu.memory_space<vmem>>, %arg2: memref<3x48x128xbf16, #tpu.memory_space<vmem>>, %arg3: memref<1x16x128xbf16, #tpu.memory_space<vmem>>, %arg4: memref<1x2x128xf32, #tpu.memory_space<vmem>>, %arg5: memref<18x48xf32, #tpu.memory_space<vmem>>) attributes {dimension_semantics = [#tpu.dimension_semantics<parallel>], iteration_bounds = array<i64: 2>, scalar_prefetch = 0 : i64, scratch_operands = 1 : i64, tpu.core_type = #tpu.core_type<tc>, window_params = [{transform_indices = @transform_0, window_bounds = array<i64: 1, 16, 48>}, {pipeline_mode = #tpu.pipeline_mode<synchronous>, transform_indices = @transform_1, window_bounds = array<i64: 3, 48, 128>}, {transform_indices = @transform_2, window_bounds = array<i64: 1, 16, 128>}, {transform_indices = @transform_3, window_bounds = array<i64: 1, 2, 128>}]} {
    %cst = arith.constant 0.000000e+00 : f32
    %0 = vector.broadcast %cst : f32 to vector<1x48xf32>
    %c0 = arith.constant 0 : index
    %c0_0 = arith.constant 0 : index
    %1 = vector.load %arg5[%c0, %c0_0] : memref<18x48xf32, #tpu.memory_space<vmem>>, vector<1x48xf32>
    tpu.vector_store %arg5[%c0, %c0_0], %0 {strides = array<i32>} : memref<18x48xf32, #tpu.memory_space<vmem>>, vector<1x48xf32>,
    %cst_1 = arith.constant 0.000000e+00 : f32
    %2 = vector.broadcast %cst_1 : f32 to vector<1x48xf32>
    %c17 = arith.constant 17 : index
    %c0_2 = arith.constant 0 : index
    %3 = vector.load %arg5[%c17, %c0_2] : memref<18x48xf32, #tpu.memory_space<vmem>>, vector<1x48xf32>
    tpu.vector_store %arg5[%c17, %c0_2], %2 {strides = array<i32>} : memref<18x48xf32, #tpu.memory_space<vmem>>, vector<1x48xf32>,
    %c0_3 = arith.constant 0 : index
    %c0_4 = arith.constant 0 : index
    %c0_5 = arith.constant 0 : index
    %4 = vector.load %arg1[%c0_3, %c0_4, %c0_5] : memref<1x16x48xf32, #tpu.memory_space<vmem>>, vector<1x16x48xf32>
    %5 = vector.shape_cast %4 : vector<1x16x48xf32> to vector<16x48xf32>
    %c1 = arith.constant 1 : index
    %c0_6 = arith.constant 0 : index
    %6 = vector.load %arg5[%c1, %c0_6] : memref<18x48xf32, #tpu.memory_space<vmem>>, vector<16x48xf32>
    tpu.vector_store %arg5[%c1, %c0_6], %5 {strides = array<i32>} : memref<18x48xf32, #tpu.memory_space<vmem>>, vector<16x48xf32>,
    %c0_7 = arith.constant 0 : index
    %c0_8 = arith.constant 0 : index
    %7 = vector.load %arg5[%c0_7, %c0_8] : memref<18x48xf32, #tpu.memory_space<vmem>>, vector<16x48xf32>
    %8 = arith.truncf %7 : vector<16x48xf32> to vector<16x48xbf16>
    %c0_9 = arith.constant 0 : index
    %c0_10 = arith.constant 0 : index
    %c0_11 = arith.constant 0 : index
    %9 = vector.load %arg2[%c0_9, %c0_10, %c0_11] : memref<3x48x128xbf16, #tpu.memory_space<vmem>>, vector<1x48x128xbf16>
    %10 = vector.shape_cast %9 : vector<1x48x128xbf16> to vector<48x128xbf16>
    %cst_12 = arith.constant dense<0.000000e+00> : vector<16x128xf32>
    %11 = tpu.matmul %8, %10, %cst_12 {dimension_numbers = #tpu.dot_dimension_numbers<[1], [0], [0], [1], [0, 0, 1, 1], [], []>} : vector<16x48xbf16>, vector<48x128xbf16>, vector<16x128xf32> -> vector<16x128xf32>
    %c1_13 = arith.constant 1 : index
    %c0_14 = arith.constant 0 : index
    %12 = vector.load %arg5[%c1_13, %c0_14] : memref<18x48xf32, #tpu.memory_space<vmem>>, vector<16x48xf32>
    %13 = arith.truncf %12 : vector<16x48xf32> to vector<16x48xbf16>
    %c1_15 = arith.constant 1 : index
    %c0_16 = arith.constant 0 : index
    %c0_17 = arith.constant 0 : index
    %14 = vector.load %arg2[%c1_15, %c0_16, %c0_17] : memref<3x48x128xbf16, #tpu.memory_space<vmem>>, vector<1x48x128xbf16>
    %15 = vector.shape_cast %14 : vector<1x48x128xbf16> to vector<48x128xbf16>
    %cst_18 = arith.constant dense<0.000000e+00> : vector<16x128xf32>
    %16 = tpu.matmul %13, %15, %cst_18 {dimension_numbers = #tpu.dot_dimension_numbers<[1], [0], [0], [1], [0, 0, 1, 1], [], []>} : vector<16x48xbf16>, vector<48x128xbf16>, vector<16x128xf32> -> vector<16x128xf32>
    %17 = arith.addf %11, %16 : vector<16x128xf32>
    %c2 = arith.constant 2 : index
    %c0_19 = arith.constant 0 : index
    %18 = vector.load %arg5[%c2, %c0_19] : memref<18x48xf32, #tpu.memory_space<vmem>>, vector<16x48xf32>
    %19 = arith.truncf %18 : vector<16x48xf32> to vector<16x48xbf16>
    %c2_20 = arith.constant 2 : index
    %c0_21 = arith.constant 0 : index
    %c0_22 = arith.constant 0 : index
    %20 = vector.load %arg2[%c2_20, %c0_21, %c0_22] : memref<3x48x128xbf16, #tpu.memory_space<vmem>>, vector<1x48x128xbf16>
    %21 = vector.shape_cast %20 : vector<1x48x128xbf16> to vector<48x128xbf16>
    %cst_23 = arith.constant dense<0.000000e+00> : vector<16x128xf32>
    %22 = tpu.matmul %19, %21, %cst_23 {dimension_numbers = #tpu.dot_dimension_numbers<[1], [0], [0], [1], [0, 0, 1, 1], [], []>} : vector<16x48xbf16>, vector<48x128xbf16>, vector<16x128xf32> -> vector<16x128xf32>
    %23 = arith.addf %17, %22 : vector<16x128xf32>
    %cst_24 = arith.constant dense<0.000000e+00> : vector<128xf32>
    %24 = vector.multi_reduction <add>, %23, %cst_24 [0] : vector<16x128xf32> to vector<128xf32>
    %25 = vector.shape_cast %24 : vector<128xf32> to vector<1x128xf32>
    %26 = arith.mulf %23, %23 : vector<16x128xf32>
    %cst_25 = arith.constant dense<0.000000e+00> : vector<128xf32>
    %27 = vector.multi_reduction <add>, %26, %cst_25 [0] : vector<16x128xf32> to vector<128xf32>
    %28 = vector.shape_cast %27 : vector<128xf32> to vector<1x128xf32>
    %29 = tpu.concatenate %25, %28 in 0 : vector<1x128xf32>, vector<1x128xf32> -> vector<2x128xf32>
    %30 = vector.shape_cast %29 : vector<2x128xf32> to vector<1x2x128xf32>
    %c0_26 = arith.constant 0 : index
    %c0_27 = arith.constant 0 : index
    %c0_28 = arith.constant 0 : index
    %31 = vector.load %arg4[%c0_26, %c0_27, %c0_28] : memref<1x2x128xf32, #tpu.memory_space<vmem>>, vector<1x2x128xf32>
    tpu.vector_store %arg4[%c0_26, %c0_27, %c0_28], %30 {strides = array<i32>} : memref<1x2x128xf32, #tpu.memory_space<vmem>>, vector<1x2x128xf32>,
    %32 = vector.shape_cast %23 : vector<16x128xf32> to vector<1x16x128xf32>
    %33 = arith.truncf %32 : vector<1x16x128xf32> to vector<1x16x128xbf16>
    %c0_29 = arith.constant 0 : index
    %c0_30 = arith.constant 0 : index
    %c0_31 = arith.constant 0 : index
    %34 = vector.load %arg3[%c0_29, %c0_30, %c0_31] : memref<1x16x128xbf16, #tpu.memory_space<vmem>>, vector<1x16x128xbf16>
    tpu.vector_store %arg3[%c0_29, %c0_30, %c0_31], %33 {strides = array<i32>} : memref<1x16x128xbf16, #tpu.memory_space<vmem>>, vector<1x16x128xbf16>,
    return
  }
  func.func @transform_0(%arg0: i32) -> (i32, i32, i32) {
    %c0_i32 = arith.constant 0 : i32
    %c0_i32_0 = arith.constant 0 : i32
    %c0_i32_1 = arith.constant 0 : i32
    return %arg0, %c0_i32, %c0_i32_0 : i32, i32, i32
  }
  func.func @transform_1(%arg0: i32) -> (i32, i32, i32) {
    %c0_i32 = arith.constant 0 : i32
    %c0_i32_0 = arith.constant 0 : i32
    %c0_i32_1 = arith.constant 0 : i32
    %c0_i32_2 = arith.constant 0 : i32
    return %c0_i32, %c0_i32_0, %c0_i32_1 : i32, i32, i32
  }
  func.func @transform_2(%arg0: i32) -> (i32, i32, i32) {
    %c0_i32 = arith.constant 0 : i32
    %c0_i32_0 = arith.constant 0 : i32
    %c0_i32_1 = arith.constant 0 : i32
    return %arg0, %c0_i32, %c0_i32_0 : i32, i32, i32
  }
  func.func @transform_3(%arg0: i32) -> (i32, i32, i32) {
    %c0_i32 = arith.constant 0 : i32
    %c0_i32_0 = arith.constant 0 : i32
    %c0_i32_1 = arith.constant 0 : i32
    return %arg0, %c0_i32, %c0_i32_0 : i32, i32, i32
  }
}

module attributes {stable_mosaic.version = 11 : i64} {
  func.func @_bn_relu_conv2_kernel(%arg0: i32, %arg1: memref<1x16x128xbf16, #tpu.memory_space<vmem>>, %arg2: memref<1x128xf32, #tpu.memory_space<vmem>>, %arg3: memref<1x128xf32, #tpu.memory_space<vmem>>, %arg4: memref<3x128x128xbf16, #tpu.memory_space<vmem>>, %arg5: memref<1x16x128xbf16, #tpu.memory_space<vmem>>, %arg6: memref<1x2x128xf32, #tpu.memory_space<vmem>>, %arg7: memref<18x128xf32, #tpu.memory_space<vmem>>) attributes {dimension_semantics = [#tpu.dimension_semantics<parallel>], iteration_bounds = array<i64: 2>, scalar_prefetch = 0 : i64, scratch_operands = 1 : i64, tpu.core_type = #tpu.core_type<tc>, window_params = [{transform_indices = @transform_0, window_bounds = array<i64: 1, 16, 128>}, {pipeline_mode = #tpu.pipeline_mode<synchronous>, transform_indices = @transform_1, window_bounds = array<i64: 1, 128>}, {pipeline_mode = #tpu.pipeline_mode<synchronous>, transform_indices = @transform_2, window_bounds = array<i64: 1, 128>}, {pipeline_mode = #tpu.pipeline_mode<synchronous>, transform_indices = @transform_3, window_bounds = array<i64: 3, 128, 128>}, {transform_indices = @transform_4, window_bounds = array<i64: 1, 16, 128>}, {transform_indices = @transform_5, window_bounds = array<i64: 1, 2, 128>}]} {
    %cst = arith.constant 0.000000e+00 : f32
    %0 = vector.broadcast %cst : f32 to vector<1x128xf32>
    %c0 = arith.constant 0 : index
    %c0_0 = arith.constant 0 : index
    %1 = vector.load %arg7[%c0, %c0_0] : memref<18x128xf32, #tpu.memory_space<vmem>>, vector<1x128xf32>
    tpu.vector_store %arg7[%c0, %c0_0], %0 {strides = array<i32>} : memref<18x128xf32, #tpu.memory_space<vmem>>, vector<1x128xf32>,
    %cst_1 = arith.constant 0.000000e+00 : f32
    %2 = vector.broadcast %cst_1 : f32 to vector<1x128xf32>
    %c17 = arith.constant 17 : index
    %c0_2 = arith.constant 0 : index
    %3 = vector.load %arg7[%c17, %c0_2] : memref<18x128xf32, #tpu.memory_space<vmem>>, vector<1x128xf32>
    tpu.vector_store %arg7[%c17, %c0_2], %2 {strides = array<i32>} : memref<18x128xf32, #tpu.memory_space<vmem>>, vector<1x128xf32>,
    %c0_3 = arith.constant 0 : index
    %c0_4 = arith.constant 0 : index
    %c0_5 = arith.constant 0 : index
    %4 = vector.load %arg1[%c0_3, %c0_4, %c0_5] : memref<1x16x128xbf16, #tpu.memory_space<vmem>>, vector<1x16x128xbf16>
    %5 = vector.shape_cast %4 : vector<1x16x128xbf16> to vector<16x128xbf16>
    %6 = arith.extf %5 : vector<16x128xbf16> to vector<16x128xf32>
    %c0_6 = arith.constant 0 : index
    %c0_7 = arith.constant 0 : index
    %7 = vector.load %arg2[%c0_6, %c0_7] : memref<1x128xf32, #tpu.memory_space<vmem>>, vector<1x128xf32>
    %8 = vector.broadcast %7 : vector<1x128xf32> to vector<16x128xf32>
    %9 = arith.mulf %6, %8 : vector<16x128xf32>
    %c0_8 = arith.constant 0 : index
    %c0_9 = arith.constant 0 : index
    %10 = vector.load %arg3[%c0_8, %c0_9] : memref<1x128xf32, #tpu.memory_space<vmem>>, vector<1x128xf32>
    %11 = vector.broadcast %10 : vector<1x128xf32> to vector<16x128xf32>
    %12 = arith.addf %9, %11 : vector<16x128xf32>
    %cst_10 = arith.constant 0.000000e+00 : f32
    %13 = vector.broadcast %cst_10 : f32 to vector<16x128xf32>
    %14 = arith.maximumf %12, %13 : vector<16x128xf32>
    %c1 = arith.constant 1 : index
    %c0_11 = arith.constant 0 : index
    %15 = vector.load %arg7[%c1, %c0_11] : memref<18x128xf32, #tpu.memory_space<vmem>>, vector<16x128xf32>
    tpu.vector_store %arg7[%c1, %c0_11], %14 {strides = array<i32>} : memref<18x128xf32, #tpu.memory_space<vmem>>, vector<16x128xf32>,
    %c0_12 = arith.constant 0 : index
    %c0_13 = arith.constant 0 : index
    %16 = vector.load %arg7[%c0_12, %c0_13] : memref<18x128xf32, #tpu.memory_space<vmem>>, vector<16x128xf32>
    %17 = arith.truncf %16 : vector<16x128xf32> to vector<16x128xbf16>
    %c0_14 = arith.constant 0 : index
    %c0_15 = arith.constant 0 : index
    %c0_16 = arith.constant 0 : index
    %18 = vector.load %arg4[%c0_14, %c0_15, %c0_16] : memref<3x128x128xbf16, #tpu.memory_space<vmem>>, vector<1x128x128xbf16>
    %19 = vector.shape_cast %18 : vector<1x128x128xbf16> to vector<128x128xbf16>
    %cst_17 = arith.constant dense<0.000000e+00> : vector<16x128xf32>
    %20 = tpu.matmul %17, %19, %cst_17 {dimension_numbers = #tpu.dot_dimension_numbers<[1], [0], [0], [1], [0, 0, 1, 1], [], []>} : vector<16x128xbf16>, vector<128x128xbf16>, vector<16x128xf32> -> vector<16x128xf32>
    %c1_18 = arith.constant 1 : index
    %c0_19 = arith.constant 0 : index
    %21 = vector.load %arg7[%c1_18, %c0_19] : memref<18x128xf32, #tpu.memory_space<vmem>>, vector<16x128xf32>
    %22 = arith.truncf %21 : vector<16x128xf32> to vector<16x128xbf16>
    %c1_20 = arith.constant 1 : index
    %c0_21 = arith.constant 0 : index
    %c0_22 = arith.constant 0 : index
    %23 = vector.load %arg4[%c1_20, %c0_21, %c0_22] : memref<3x128x128xbf16, #tpu.memory_space<vmem>>, vector<1x128x128xbf16>
    %24 = vector.shape_cast %23 : vector<1x128x128xbf16> to vector<128x128xbf16>
    %cst_23 = arith.constant dense<0.000000e+00> : vector<16x128xf32>
    %25 = tpu.matmul %22, %24, %cst_23 {dimension_numbers = #tpu.dot_dimension_numbers<[1], [0], [0], [1], [0, 0, 1, 1], [], []>} : vector<16x128xbf16>, vector<128x128xbf16>, vector<16x128xf32> -> vector<16x128xf32>
    %26 = arith.addf %20, %25 : vector<16x128xf32>
    %c2 = arith.constant 2 : index
    %c0_24 = arith.constant 0 : index
    %27 = vector.load %arg7[%c2, %c0_24] : memref<18x128xf32, #tpu.memory_space<vmem>>, vector<16x128xf32>
    %28 = arith.truncf %27 : vector<16x128xf32> to vector<16x128xbf16>
    %c2_25 = arith.constant 2 : index
    %c0_26 = arith.constant 0 : index
    %c0_27 = arith.constant 0 : index
    %29 = vector.load %arg4[%c2_25, %c0_26, %c0_27] : memref<3x128x128xbf16, #tpu.memory_space<vmem>>, vector<1x128x128xbf16>
    %30 = vector.shape_cast %29 : vector<1x128x128xbf16> to vector<128x128xbf16>
    %cst_28 = arith.constant dense<0.000000e+00> : vector<16x128xf32>
    %31 = tpu.matmul %28, %30, %cst_28 {dimension_numbers = #tpu.dot_dimension_numbers<[1], [0], [0], [1], [0, 0, 1, 1], [], []>} : vector<16x128xbf16>, vector<128x128xbf16>, vector<16x128xf32> -> vector<16x128xf32>
    %32 = arith.addf %26, %31 : vector<16x128xf32>
    %cst_29 = arith.constant dense<0.000000e+00> : vector<128xf32>
    %33 = vector.multi_reduction <add>, %32, %cst_29 [0] : vector<16x128xf32> to vector<128xf32>
    %34 = vector.shape_cast %33 : vector<128xf32> to vector<1x128xf32>
    %35 = arith.mulf %32, %32 : vector<16x128xf32>
    %cst_30 = arith.constant dense<0.000000e+00> : vector<128xf32>
    %36 = vector.multi_reduction <add>, %35, %cst_30 [0] : vector<16x128xf32> to vector<128xf32>
    %37 = vector.shape_cast %36 : vector<128xf32> to vector<1x128xf32>
    %38 = tpu.concatenate %34, %37 in 0 : vector<1x128xf32>, vector<1x128xf32> -> vector<2x128xf32>
    %39 = vector.shape_cast %38 : vector<2x128xf32> to vector<1x2x128xf32>
    %c0_31 = arith.constant 0 : index
    %c0_32 = arith.constant 0 : index
    %c0_33 = arith.constant 0 : index
    %40 = vector.load %arg6[%c0_31, %c0_32, %c0_33] : memref<1x2x128xf32, #tpu.memory_space<vmem>>, vector<1x2x128xf32>
    tpu.vector_store %arg6[%c0_31, %c0_32, %c0_33], %39 {strides = array<i32>} : memref<1x2x128xf32, #tpu.memory_space<vmem>>, vector<1x2x128xf32>,
    %41 = vector.shape_cast %32 : vector<16x128xf32> to vector<1x16x128xf32>
    %42 = arith.truncf %41 : vector<1x16x128xf32> to vector<1x16x128xbf16>
    %c0_34 = arith.constant 0 : index
    %c0_35 = arith.constant 0 : index
    %c0_36 = arith.constant 0 : index
    %43 = vector.load %arg5[%c0_34, %c0_35, %c0_36] : memref<1x16x128xbf16, #tpu.memory_space<vmem>>, vector<1x16x128xbf16>
    tpu.vector_store %arg5[%c0_34, %c0_35, %c0_36], %42 {strides = array<i32>} : memref<1x16x128xbf16, #tpu.memory_space<vmem>>, vector<1x16x128xbf16>,
    return
  }
  func.func @transform_0(%arg0: i32) -> (i32, i32, i32) {
    %c0_i32 = arith.constant 0 : i32
    %c0_i32_0 = arith.constant 0 : i32
    %c0_i32_1 = arith.constant 0 : i32
    return %arg0, %c0_i32, %c0_i32_0 : i32, i32, i32
  }
  func.func @transform_1(%arg0: i32) -> (i32, i32) {
    %c0_i32 = arith.constant 0 : i32
    %c0_i32_0 = arith.constant 0 : i32
    %c0_i32_1 = arith.constant 0 : i32
    return %c0_i32, %c0_i32_0 : i32, i32
  }
  func.func @transform_2(%arg0: i32) -> (i32, i32) {
    %c0_i32 = arith.constant 0 : i32
    %c0_i32_0 = arith.constant 0 : i32
    %c0_i32_1 = arith.constant 0 : i32
    return %c0_i32, %c0_i32_0 : i32, i32
  }
  func.func @transform_3(%arg0: i32) -> (i32, i32, i32) {
    %c0_i32 = arith.constant 0 : i32
    %c0_i32_0 = arith.constant 0 : i32
    %c0_i32_1 = arith.constant 0 : i32
    %c0_i32_2 = arith.constant 0 : i32
    return %c0_i32, %c0_i32_0, %c0_i32_1 : i32, i32, i32
  }
  func.func @transform_4(%arg0: i32) -> (i32, i32, i32) {
    %c0_i32 = arith.constant 0 : i32
    %c0_i32_0 = arith.constant 0 : i32
    %c0_i32_1 = arith.constant 0 : i32
    return %arg0, %c0_i32, %c0_i32_0 : i32, i32, i32
  }
  func.func @transform_5(%arg0: i32) -> (i32, i32, i32) {
    %c0_i32 = arith.constant 0 : i32
    %c0_i32_0 = arith.constant 0 : i32
    %c0_i32_1 = arith.constant 0 : i32
    return %arg0, %c0_i32, %c0_i32_0 : i32, i32, i32
  }
}

module attributes {stable_mosaic.version = 11 : i64} {
  func.func @_bn_relu_kernel(%arg0: i32, %arg1: memref<1x16x128xbf16, #tpu.memory_space<vmem>>, %arg2: memref<1x128xf32, #tpu.memory_space<vmem>>, %arg3: memref<1x128xf32, #tpu.memory_space<vmem>>, %arg4: memref<1x16x128xf32, #tpu.memory_space<vmem>>) attributes {dimension_semantics = [#tpu.dimension_semantics<parallel>], iteration_bounds = array<i64: 2>, scalar_prefetch = 0 : i64, scratch_operands = 0 : i64, tpu.core_type = #tpu.core_type<tc>, window_params = [{transform_indices = @transform_0, window_bounds = array<i64: 1, 16, 128>}, {pipeline_mode = #tpu.pipeline_mode<synchronous>, transform_indices = @transform_1, window_bounds = array<i64: 1, 128>}, {pipeline_mode = #tpu.pipeline_mode<synchronous>, transform_indices = @transform_2, window_bounds = array<i64: 1, 128>}, {transform_indices = @transform_3, window_bounds = array<i64: 1, 16, 128>}]} {
    %c0 = arith.constant 0 : index
    %c0_0 = arith.constant 0 : index
    %c0_1 = arith.constant 0 : index
    %0 = vector.load %arg1[%c0, %c0_0, %c0_1] : memref<1x16x128xbf16, #tpu.memory_space<vmem>>, vector<1x16x128xbf16>
    %1 = arith.extf %0 : vector<1x16x128xbf16> to vector<1x16x128xf32>
    %c0_2 = arith.constant 0 : index
    %c0_3 = arith.constant 0 : index
    %2 = vector.load %arg2[%c0_2, %c0_3] : memref<1x128xf32, #tpu.memory_space<vmem>>, vector<1x128xf32>
    %3 = vector.shape_cast %2 : vector<1x128xf32> to vector<1x1x128xf32>
    %4 = vector.broadcast %3 : vector<1x1x128xf32> to vector<1x16x128xf32>
    %5 = arith.mulf %1, %4 : vector<1x16x128xf32>
    %c0_4 = arith.constant 0 : index
    %c0_5 = arith.constant 0 : index
    %6 = vector.load %arg3[%c0_4, %c0_5] : memref<1x128xf32, #tpu.memory_space<vmem>>, vector<1x128xf32>
    %7 = vector.shape_cast %6 : vector<1x128xf32> to vector<1x1x128xf32>
    %8 = vector.broadcast %7 : vector<1x1x128xf32> to vector<1x16x128xf32>
    %9 = arith.addf %5, %8 : vector<1x16x128xf32>
    %cst = arith.constant 0.000000e+00 : f32
    %10 = vector.broadcast %cst : f32 to vector<1x16x128xf32>
    %11 = arith.maximumf %9, %10 : vector<1x16x128xf32>
    %c0_6 = arith.constant 0 : index
    %c0_7 = arith.constant 0 : index
    %c0_8 = arith.constant 0 : index
    %12 = vector.load %arg4[%c0_6, %c0_7, %c0_8] : memref<1x16x128xf32, #tpu.memory_space<vmem>>, vector<1x16x128xf32>
    tpu.vector_store %arg4[%c0_6, %c0_7, %c0_8], %11 {strides = array<i32>} : memref<1x16x128xf32, #tpu.memory_space<vmem>>, vector<1x16x128xf32>,
    return
  }
  func.func @transform_0(%arg0: i32) -> (i32, i32, i32) {
    %c0_i32 = arith.constant 0 : i32
    %c0_i32_0 = arith.constant 0 : i32
    %c0_i32_1 = arith.constant 0 : i32
    return %arg0, %c0_i32, %c0_i32_0 : i32, i32, i32
  }
  func.func @transform_1(%arg0: i32) -> (i32, i32) {
    %c0_i32 = arith.constant 0 : i32
    %c0_i32_0 = arith.constant 0 : i32
    %c0_i32_1 = arith.constant 0 : i32
    return %c0_i32, %c0_i32_0 : i32, i32
  }
  func.func @transform_2(%arg0: i32) -> (i32, i32) {
    %c0_i32 = arith.constant 0 : i32
    %c0_i32_0 = arith.constant 0 : i32
    %c0_i32_1 = arith.constant 0 : i32
    return %c0_i32, %c0_i32_0 : i32, i32
  }
  func.func @transform_3(%arg0: i32) -> (i32, i32, i32) {
    %c0_i32 = arith.constant 0 : i32
    %c0_i32_0 = arith.constant 0 : i32
    %c0_i32_1 = arith.constant 0 : i32
    return %arg0, %c0_i32, %c0_i32_0 : i32, i32, i32
  }
}

</mosaic_0001>

<llo_original>
// kernel: tile.23
$region0: #{tile.23}
  #allocation0 [shape = 's32[1]{0}', space=sflag, size = 0x4, scoped, tag = 'scoped memory for tile.23']
  %s0 = inlined_call_operand.vmem [shape: f32[8], index: 0, kind: input, shape index: {}]
  %s1 = inlined_call_operand.vmem [shape: f32[16,8], index: 1, kind: output, shape index: {}]
  // Predicated region
  $region2: #{tile.23} parent=0 // pred_check
    _
  $region3: #{tile.23} parent=0 // pred_check_branch
    %3 = sbr.rel (0) target = $region5
  $region4: #{tile.23} parent=0 // pred_region
    _
  $region5: #{tile.23} parent=0 // pred_fallthru
    _
  %v4 = vld [vmem:[%s0] ss:$0 sm:$0xff]
  %5 = vst [vmem:[%s1] sm:$0xff] %v4
  %s6 = scalar_lea.vmem %s1, 8
  %7 = vst [vmem:[%s6] sm:$0xff] %v4

// kernel: tile.24
$region0: #{tile.24}
  %s0 = inlined_call_operand.vmem [shape: f32[16,8], index: 0, kind: input, shape index: {}]
  %s1 = inlined_call_operand.vmem [shape: f32[1,128], index: 1, kind: output, shape index: {}]
  $region1: #{tile.24} parent=0
    #allocation0 [shape = 'u8[4096]{0}', space=vmem, size = 0x1000, scoped, tag = 'scoped mem for output reshape']
    %v2 = vld [vmem:[%s0] sm:$0x1]
    %vm3 = vcmask 64512
    %4 = vst.msk [vmem:[#allocation0] sm:$0x1] %vm3, %v2
    %s5 = scalar_lea.vmem %s0, 15
    %v6 = vld [vmem:[%s5] sm:$0x1]
    %7 = vrot.lane.b32.xlu0 %v6, 120
    %v8 = vpop.permute.xlu0 %7
    %vm9 = vcmask 1048512
    %10 = vst.msk [vmem:[#allocation0] sm:$0x1] %vm9, %v8
    %s11 = scalar_lea.vmem %s0, 14
    %v12 = vld [vmem:[%s11] sm:$0x1]
    %13 = vrot.lane.b32.xlu0 %v12, 112
    %v14 = vpop.permute.xlu0 %13
    %vm15 = vcmask 982912
    %16 = vst.msk [vmem:[#allocation0] sm:$0x1] %vm15, %v14
    %s17 = scalar_lea.vmem %s0, 13
    %v18 = vld [vmem:[%s17] sm:$0x1]
    %19 = vrot.lane.b32.xlu0 %v18, 104
    %v20 = vpop.permute.xlu0 %19
    %vm21 = vcmask 917312
    %22 = vst.msk [vmem:[#allocation0] sm:$0x1] %vm21, %v20
    %s23 = scalar_lea.vmem %s0, 12
    %v24 = vld [vmem:[%s23] sm:$0x1]
    %25 = vrot.lane.b32.xlu0 %v24, 96
    %v26 = vpop.permute.xlu0 %25
    %vm27 = vcmask 851712
    %28 = vst.msk [vmem:[#allocation0] sm:$0x1] %vm27, %v26
    %s29 = scalar_lea.vmem %s0, 11
    %v30 = vld [vmem:[%s29] sm:$0x1]
    %31 = vrot.lane.b32.xlu0 %v30, 88
    %v32 = vpop.permute.xlu0 %31
    %vm33 = vcmask 786112
    %34 = vst.msk [vmem:[#allocation0] sm:$0x1] %vm33, %v32
    %s35 = scalar_lea.vmem %s0, 10
    %v36 = vld [vmem:[%s35] sm:$0x1]
    %37 = vrot.lane.b32.xlu0 %v36, 80
    %v38 = vpop.permute.xlu0 %37
    %vm39 = vcmask 720512
    %40 = vst.msk [vmem:[#allocation0] sm:$0x1] %vm39, %v38
    %s41 = scalar_lea.vmem %s0, 9
    %v42 = vld [vmem:[%s41] sm:$0x1]
    %43 = vrot.lane.b32.xlu0 %v42, 72
    %v44 = vpop.permute.xlu0 %43
    %vm45 = vcmask 654912
    %46 = vst.msk [vmem:[#allocation0] sm:$0x1] %vm45, %v44
    %s47 = scalar_lea.vmem %s0, 8
    %v48 = vld [vmem:[%s47] sm:$0x1]
    %49 = vrot.lane.b32.xlu0 %v48, 64
    %v50 = vpop.permute.xlu0 %49
    %vm51 = vcmask 589312
    %52 = vst.msk [vmem:[#allocation0] sm:$0x1] %vm51, %v50
    %s53 = scalar_lea.vmem %s0, 7
    %v54 = vld [vmem:[%s53] sm:$0x1]
    %55 = vrot.lane.b32.xlu0 %v54, 56
    %v56 = vpop.permute.xlu0 %55
    %vm57 = vcmask 523712
    %58 = vst.msk [vmem:[#allocation0] sm:$0x1] %vm57, %v56
    %s59 = scalar_lea.vmem %s0, 6
    %v60 = vld [vmem:[%s59] sm:$0x1]
    %61 = vrot.lane.b32.xlu0 %v60, 48
    %v62 = vpop.permute.xlu0 %61
    %vm63 = vcmask 458112
    %64 = vst.msk [vmem:[#allocation0] sm:$0x1] %vm63, %v62
    %s65 = scalar_lea.vmem %s0, 5
    %v66 = vld [vmem:[%s65] sm:$0x1]
    %67 = vrot.lane.b32.xlu0 %v66, 40
    %v68 = vpop.permute.xlu0 %67
    %vm69 = vcmask 392512
    %70 = vst.msk [vmem:[#allocation0] sm:$0x1] %vm69, %v68
    %s71 = scalar_lea.vmem %s0, 4
    %v72 = vld [vmem:[%s71] sm:$0x1]
    %73 = vrot.lane.b32.xlu0 %v72, 32
    %v74 = vpop.permute.xlu0 %73
    %vm75 = vcmask 326912
    %76 = vst.msk [vmem:[#allocation0] sm:$0x1] %vm75, %v74
    %s77 = scalar_lea.vmem %s0, 3
    %v78 = vld [vmem:[%s77] sm:$0x1]
    %79 = vrot.lane.b32.xlu0 %v78, 24
    %v80 = vpop.permute.xlu0 %79
    %vm81 = vcmask 261312
    %82 = vst.msk [vmem:[#allocation0] sm:$0x1] %vm81, %v80
    %s83 = scalar_lea.vmem %s0, 2
    %v84 = vld [vmem:[%s83] sm:$0x1]
    %85 = vrot.lane.b32.xlu0 %v84, 16
    %v86 = vpop.permute.xlu0 %85
    %vm87 = vcmask 195712
    %88 = vst.msk [vmem:[#allocation0] sm:$0x1] %vm87, %v86
    %s89 = scalar_lea.vmem %s0, 1
    %v90 = vld [vmem:[%s89] sm:$0x1]
    %91 = vrot.lane.b32.xlu0 %v90, 8
    %v92 = vpop.permute.xlu0 %91
    %vm93 = vcmask 130112
    %94 = vst.msk [vmem:[#allocation0] sm:$0x1] %vm93, %v92
    %s96 = sshllo.u32 0, 1
    %v98 = vld [vmem:[#allocation0] sm:%s96]
    %s99 = sshllo.u32 0, 1
    %100 = vst [vmem:[%s1] sm:%s99] %v98

// kernel: conv_block_pallas.3
$region0: #{conv_block_pallas.3}
  #allocation0 [shape = 'u32[]', space=smem, size = 0x4, offset = 0x4, fixed_abs, tag = 'smem constant byte address 0x4 - core index']
  #allocation1 [shape = 'u32[144,128]{1,0:T(1,128)}', space=vmem, size = 0x12000, scoped, tag = 'internal scratch']
  #allocation2 [shape = 'f32[18,48]{1,0:T(8,128)}', space=vmem, size = 0x3000, scoped, tag = 'scratch operand']
  %s0 = inlined_call_operand.vmem [shape: f32[2,16,48], index: 0, kind: input, shape index: {}]
  %s1 = inlined_call_operand.vmem [shape: bf16[3,48,128], index: 1, kind: input, shape index: {}]
  %s2 = inlined_call_operand.vmem [shape: bf16[2,16,128], index: 2, kind: output, shape index: {0}]
  %s3 = inlined_call_operand.vmem [shape: f32[2,2,128], index: 3, kind: output, shape index: {1}]
  %4 = xla_tuple %s2, %s3
  %s5 = sld [smem:[#allocation0]]
  $region49: #{conv_block_pallas.3} parent=0
    _
  %s7 = ssub.s32 1, %s5
  %s8 = scalar_select 0, %s7, %s5
  loop: start=0, step=1, limit=4
  $region2: #{conv_block_pallas.3} parent=0 // loop_pre_header
    _
  $region3: #{conv_block_pallas.3} parent=0 // loop_header
    %s10 = sphi 0, %s14
    %p11 = scmp.ge.s32.totalorder %s10, 4
    %s20 = sphi 0, %s22
    %s23 = sphi 0, %s20
    %s24 = sphi 0, %s23
    %s40 = sphi 0, %s24
    %s44 = sphi 0, %s44
    %s46 = sphi 0, %s44
    %s47 = sphi 0, %s46
    %s61 = sphi 0, %s47
    %s67 = sphi 0, %s69
    %s70 = sphi 0, %s67
    %s71 = sphi 0, %s70
    %s87 = sphi 0, %s71
    %s93 = sphi 0, %s95
    %s96 = sphi 0, %s93
    %s97 = sphi 0, %s96
    %s113 = sphi 0, %s97
  $region4: #{conv_block_pallas.3} parent=0 // loop_header_branch
    %13 = sbr.rel (%p11) target = $region8
  $region5: #{conv_block_pallas.3} parent=0 // loop_body
    %s15 = ssub.s32 %s10, 1
    %s16 = ssub.s32 %s10, 2
    %s17 = sadd.s32 %s10, 1
    %s18 = ssub.s32 %s10, %s17
    %p19 = scmp.eq.s32.totalorder %s18, 0
    %s21 = sadd.s32 %s20, 1
    %s22 = scalar_select %p19, %s20, %s21
    %p25 = pneg %p19
    %p26 = scmp.eq.s32.totalorder %s10, 1
    %p27 = por %p25, %p26
    %p28 = scmp.ne.s32.totalorder %s20, %s23
    %p29 = scmp.eq.s32.totalorder %s10, 0
    %p30 = por %p28, %p29
    %p31 = scmp.ne.s32.totalorder %s20, %s23
    %p32 = scmp.eq.s32.totalorder %s15, 1
    %p33 = por %p31, %p32
    %p34 = scmp.ne.s32.totalorder %s23, %s24
    %p35 = scmp.eq.s32.totalorder %s15, 0
    %p36 = por %p34, %p35
    %p37 = scmp.ne.s32.totalorder %s23, %s24
    %p38 = scmp.eq.s32.totalorder %s16, 1
    %p39 = por %p37, %p38
    %p41 = scmp.ne.s32.totalorder %s24, %s40
    %p42 = scmp.eq.s32.totalorder %s16, 0
    %p43 = por %p41, %p42
    %s45 = sadd.s32 %s44, 1
    %p48 = scmp.eq.s32.totalorder %s10, 1
    %p49 = scmp.ne.s32.totalorder %s44, %s46
    %p50 = scmp.eq.s32.totalorder %s10, 0
    %p51 = por %p49, %p50
    %p52 = scmp.ne.s32.totalorder %s44, %s46
    %p53 = scmp.eq.s32.totalorder %s15, 1
    %p54 = por %p52, %p53
    %p55 = scmp.ne.s32.totalorder %s46, %s47
    %p56 = scmp.eq.s32.totalorder %s15, 0
    %p57 = por %p55, %p56
    %p58 = scmp.ne.s32.totalorder %s46, %s47
    %p59 = scmp.eq.s32.totalorder %s16, 1
    %p60 = por %p58, %p59
    %p62 = scmp.ne.s32.totalorder %s47, %s61
    %p63 = scmp.eq.s32.totalorder %s16, 0
    %p64 = por %p62, %p63
    %s65 = ssub.s32 %s10, %s17
    %p66 = scmp.eq.s32.totalorder %s65, 0
    %s68 = sadd.s32 %s67, 1
    %s69 = scalar_select %p66, %s67, %s68
    %p72 = pneg %p66
    %p73 = scmp.eq.s32.totalorder %s10, 1
    %p74 = por %p72, %p73
    %p75 = scmp.ne.s32.totalorder %s67, %s70
    %p76 = scmp.eq.s32.totalorder %s10, 0
    %p77 = por %p75, %p76
    %p78 = scmp.ne.s32.totalorder %s67, %s70
    %p79 = scmp.eq.s32.totalorder %s15, 1
    %p80 = por %p78, %p79
    %p81 = scmp.ne.s32.totalorder %s70, %s71
    %p82 = scmp.eq.s32.totalorder %s15, 0
    %p83 = por %p81, %p82
    %p84 = scmp.ne.s32.totalorder %s70, %s71
    %p85 = scmp.eq.s32.totalorder %s16, 1
    %p86 = por %p84, %p85
    %p88 = scmp.ne.s32.totalorder %s71, %s87
    %p89 = scmp.eq.s32.totalorder %s16, 0
    %p90 = por %p88, %p89
    %s91 = ssub.s32 %s10, %s17
    %p92 = scmp.eq.s32.totalorder %s91, 0
    %s94 = sadd.s32 %s93, 1
    %s95 = scalar_select %p92, %s93, %s94
    %p98 = pneg %p92
    %p99 = scmp.eq.s32.totalorder %s10, 1
    %p100 = por %p98, %p99
    %p101 = scmp.ne.s32.totalorder %s93, %s96
    %p102 = scmp.eq.s32.totalorder %s10, 0
    %p103 = por %p101, %p102
    %p104 = scmp.ne.s32.totalorder %s93, %s96
    %p105 = scmp.eq.s32.totalorder %s15, 1
    %p106 = por %p104, %p105
    %p107 = scmp.ne.s32.totalorder %s96, %s97
    %p108 = scmp.eq.s32.totalorder %s15, 0
    %p109 = por %p107, %p108
    %p110 = scmp.ne.s32.totalorder %s96, %s97
    %p111 = scmp.eq.s32.totalorder %s16, 1
    %p112 = por %p110, %p111
    %p114 = scmp.ne.s32.totalorder %s97, %s113
    %p115 = scmp.eq.s32.totalorder %s16, 0
    %p116 = por %p114, %p115
    %p117 = scmp.le.s32.totalorder 1, %s10
    %p118 = scmp.lt.s32.totalorder %s10, 3
    %p119 = pnand %p117, %p118
    %p120 = pneg %p119
    // Predicated region
    $region9: #{conv_block_pallas.3} parent=5 // pred_check
      _
    $region10: #{conv_block_pallas.3} parent=5 // pred_check_branch
      %122 = sbr.rel (%p119) target = $region12
    $region11: #{conv_block_pallas.3} parent=5 // pred_region
      %s123 = ssub.s32 %s10, 1
      // Predicated region
      $region13: #{conv_block_pallas.3} parent=11 // pred_check
        %p124 = pneg %p57
      $region14: #{conv_block_pallas.3} parent=11 // pred_check_branch
        %126 = sbr.rel (%p124) target = $region16
      $region15: #{conv_block_pallas.3} parent=11 // pred_region
        _
      $region16: #{conv_block_pallas.3} parent=11 // pred_fallthru
        _
    $region12: #{conv_block_pallas.3} parent=5 // pred_fallthru
      _
    %p127 = scmp.lt.s32.totalorder %s10, 2
    // Predicated region
    $region17: #{conv_block_pallas.3} parent=5 // pred_check
      %p128 = pneg %p127
    $region18: #{conv_block_pallas.3} parent=5 // pred_check_branch
      %130 = sbr.rel (%p128) target = $region20
    $region19: #{conv_block_pallas.3} parent=5 // pred_region
      // Predicated region
      $region21: #{conv_block_pallas.3} parent=19 // pred_check
        %p131 = pneg %p30
      $region22: #{conv_block_pallas.3} parent=19 // pred_check_branch
        %133 = sbr.rel (%p131) target = $region24
      $region23: #{conv_block_pallas.3} parent=19 // pred_region
        %p134 = scmp.lt.s32.totalorder %s10, 1
        %s135 = scalar_select %p134, %s10, 1
        %s136 = smul.addr %s135, 2
        %s137 = smul.addr %s136, 8
        %s138 = scalar_lea.vmem %s0, %s137
      $region24: #{conv_block_pallas.3} parent=19 // pred_fallthru
        _
    $region20: #{conv_block_pallas.3} parent=5 // pred_fallthru
      _
    %p139 = scmp.le.s32.totalorder 1, %s10
    %p140 = scmp.lt.s32.totalorder %s10, 3
    %p141 = pnand %p139, %p140
    %p142 = pneg %p141
    // Predicated region
    $region25: #{conv_block_pallas.3} parent=5 // pred_check
      _
    $region26: #{conv_block_pallas.3} parent=5 // pred_check_branch
      %144 = sbr.rel (%p141) target = $region28
    $region27: #{conv_block_pallas.3} parent=5 // pred_region
      %s145 = ssub.s32 %s10, 1
      %p146 = scmp.lt.s32.totalorder %s15, 1
      %s147 = scalar_select %p146, %s15, 1
      %s148 = smul.addr %s147, 2
      %s149 = smul.addr %s148, 8
      %s150 = scalar_lea.vmem %s0, %s149
      %p151 = pneg %p36
      %p152 = pneg %p33
      %p153 = pneg %p57
      %p154 = pneg %p54
      %p155 = pneg %p83
      %p156 = pneg %p80
      %p157 = scmp.lt.s32.totalorder %s15, 1
      %s158 = scalar_select %p157, %s15, 1
      %s159 = smul.addr %s158, 2
      %s160 = smul.addr %s159, 4
      %s161 = scalar_lea.vmem %s2, %s160
      %p162 = pneg %p109
      %p163 = pneg %p106
      %p164 = scmp.lt.s32.totalorder %s15, 1
      %s165 = scalar_select %p164, %s15, 1
      %s166 = smul.addr %s165, 2
      %s167 = scalar_lea.vmem %s3, %s166
      %p168 = scmp.lt.s32.totalorder %s15, 1
      %s169 = scalar_select %p168, %s15, 1
      %s170 = smul.addr %s169, 2
      %s171 = smul.addr %s170, 8
      %s172 = scalar_lea.vmem %s0, %s171
      %p173 = scmp.lt.s32.totalorder %s15, 1
      %s174 = scalar_select %p173, %s15, 1
      %s175 = smul.addr %s174, 2
      %s176 = smul.addr %s175, 4
      %s177 = scalar_lea.vmem %s2, %s176
      %p178 = scmp.lt.s32.totalorder %s15, 1
      %s179 = scalar_select %p178, %s15, 1
      %s180 = smul.addr %s179, 2
      %s181 = scalar_lea.vmem %s3, %s180
      %vm183 = vcmask 385024
      %184 = vst.msk [vmem:[#allocation2] sm:$0x1] %vm183, 0.0
      %185 = vst.msk [vmem:[#allocation2 + $0x11] sm:$0x1] %vm183, 0.0
      %v186 = vld [vmem:[%s172] sm:$0xff]
      %v187 = vld [vmem:[%s172 + $0x8] sm:$0xff]
      %vm188 = vcmask 392192
      %189 = vst.msk [vmem:[#allocation2 + $0x1] sm:$0xff] %vm188, %v186
      %190 = vst.msk [vmem:[#allocation2 + $0x9] sm:$0xff] %vm188, %v187
      %v191 = vld [vmem:[#allocation2] sm:$0xff]
      %v192 = vld [vmem:[#allocation2 + $0x8] sm:$0xff]
      %v193 = vpack.c.bf16 %v192, %v191
      %v194 = vld [vmem:[%s1] sm:$0xf]
      %v195 = vld [vmem:[%s1 + $0x4] sm:$0xf]
      %v196 = vld [vmem:[%s1 + $0x8] sm:$0xf]
      %v197 = vld [vmem:[%s1 + $0xc] sm:$0xf]
      %v198 = vld [vmem:[%s1 + $0x10] sm:$0xf]
      %v199 = vld [vmem:[%s1 + $0x14] sm:$0xf]
      %v200 = vld [vmem:[#allocation2 + $0x1] sm:$0xff]
      %v201 = vld [vmem:[#allocation2 + $0x9] sm:$0xff]
      %v202 = vpack.c.bf16 %v201, %v200
      %s203 = scalar_lea.vmem %s1, 24
      %v204 = vld [vmem:[%s203] sm:$0xf]
      %v205 = vld [vmem:[%s203 + $0x4] sm:$0xf]
      %v206 = vld [vmem:[%s203 + $0x8] sm:$0xf]
      %v207 = vld [vmem:[%s203 + $0xc] sm:$0xf]
      %v208 = vld [vmem:[%s203 + $0x10] sm:$0xf]
      %v209 = vld [vmem:[%s203 + $0x14] sm:$0xf]
      %v216 = vunpack.c.l.b16 %v204
      %v217 = vunpack.c.l.b16 %v205
      %v218 = vunpack.c.l.b16 %v206
      %v219 = vunpack.c.l.b16 %v207
      %v220 = vunpack.c.l.b16 %v208
      %v221 = vunpack.c.l.b16 %v209
      %v222 = vpack.c.b16 %v217, %v216
      %v223 = vpack.c.b16 %v219, %v218
      %v224 = vpack.c.b16 %v221, %v220
      %v229 = vsel %vm188, %v202, 0
      %231 = vmatprep.subr.bf16.mxu0 0
      %232 = vmatpush1.bf16.msra.mxu0 %v222
      %233 = vmatprep.subr.bf16.mxu0 0
      %234 = vmatpush1.bf16.msra.mxu0 %v223
      %235 = vmatprep.subr.bf16.mxu0 0
      %236 = vmatpush1.bf16.msra.mxu0 %v224
      %237 = vmatprep.subr.bf16.mxu0 0
      %238 = vmatpush1.bf16.msra.mxu0 0
      %239 = vmatprep.subr.bf16.mxu0 0
      %240 = vmatpush1.bf16.msra.mxu0 0
      %241 = vmatprep.subr.bf16.mxu0 0
      %242 = vmatpush1.bf16.msra.mxu0 0
      %243 = vmatprep.subr.bf16.mxu0 0
      %244 = vmatpush1.bf16.msra.mxu0 0
      %245 = vmatprep.subr.bf16.mxu0 0
      %246 = vmatpush1.bf16.msra.mxu0 0
      %247 = vmatprep.subr.bf16.mxu0 0
      %248 = vmatpush1.bf16.msra.mxu0 0
      %249 = vmatprep.subr.bf16.mxu0 0
      %250 = vmatpush1.bf16.msra.mxu0 0
      %251 = vmatprep.subr.bf16.mxu0 0
      %252 = vmatpush1.bf16.msra.mxu0 0
      %253 = vmatprep.subr.bf16.mxu0 0
      %254 = vmatpush1.bf16.msra.mxu0 0
      %255 = vmatprep.subr.bf16.mxu0 0
      %256 = vmatpush1.bf16.msra.mxu0 0
      %257 = vmatprep.subr.bf16.mxu0 0
      %258 = vmatpush1.bf16.msra.mxu0 0
      %259 = vmatprep.subr.bf16.mxu0 0
      %260 = vmatpush1.bf16.msra.mxu0 0
      %261 = vmatprep.subr.bf16.mxu0 0
      %262 = vmatpush1.bf16.msra.mxu0 0
      %263 = vmatprep.mubr.bf16.mxu0 0
      %264 = vmatmul.mubr.bf16.gmra.mrb[0].mxu0 %v229
      %v265 = vpop.f32.mrb[0].mxu0
      %v266 = vadd.f32 0.0, %v265
      %v267 = vpop.f32.mrb[0].mxu0
      %v268 = vpop.f32.mrb[0].mxu0
      %v269 = vadd.f32 0.0, %v268
      %v270 = vpop.f32.mrb[0].mxu0
      %271 = vdwg.mxu0
      %v278 = vunpack.c.l.b16 %v194
      %v279 = vunpack.c.l.b16 %v195
      %v280 = vunpack.c.l.b16 %v196
      %v281 = vunpack.c.l.b16 %v197
      %v282 = vunpack.c.l.b16 %v198
      %v283 = vunpack.c.l.b16 %v199
      %v284 = vpack.c.b16 %v279, %v278
      %v285 = vpack.c.b16 %v281, %v280
      %v286 = vpack.c.b16 %v283, %v282
      %v291 = vsel %vm188, %v193, 0
      %293 = vmatprep.subr.bf16.mxu0 0
      %294 = vmatpush1.bf16.msra.mxu0 %v284
      %295 = vmatprep.subr.bf16.mxu0 0
      %296 = vmatpush1.bf16.msra.mxu0 %v285
      %297 = vmatprep.subr.bf16.mxu0 0
      %298 = vmatpush1.bf16.msra.mxu0 %v286
      %299 = vmatprep.subr.bf16.mxu0 0
      %300 = vmatpush1.bf16.msra.mxu0 0
      %301 = vmatprep.subr.bf16.mxu0 0
      %302 = vmatpush1.bf16.msra.mxu0 0
      %303 = vmatprep.subr.bf16.mxu0 0
      %304 = vmatpush1.bf16.msra.mxu0 0
      %305 = vmatprep.subr.bf16.mxu0 0
      %306 = vmatpush1.bf16.msra.mxu0 0
      %307 = vmatprep.subr.bf16.mxu0 0
      %308 = vmatpush1.bf16.msra.mxu0 0
      %309 = vmatprep.subr.bf16.mxu0 0
      %310 = vmatpush1.bf16.msra.mxu0 0
      %311 = vmatprep.subr.bf16.mxu0 0
      %312 = vmatpush1.bf16.msra.mxu0 0
      %313 = vmatprep.subr.bf16.mxu0 0
      %314 = vmatpush1.bf16.msra.mxu0 0
      %315 = vmatprep.subr.bf16.mxu0 0
      %316 = vmatpush1.bf16.msra.mxu0 0
      %317 = vmatprep.subr.bf16.mxu0 0
      %318 = vmatpush1.bf16.msra.mxu0 0
      %319 = vmatprep.subr.bf16.mxu0 0
      %320 = vmatpush1.bf16.msra.mxu0 0
      %321 = vmatprep.subr.bf16.mxu0 0
      %322 = vmatpush1.bf16.msra.mxu0 0
      %323 = vmatprep.subr.bf16.mxu0 0
      %324 = vmatpush1.bf16.msra.mxu0 0
      %325 = vmatprep.mubr.bf16.mxu0 0
      %326 = vmatmul.mubr.bf16.gmra.mrb[0].mxu0 %v291
      %v327 = vpop.f32.mrb[0].mxu0
      %v328 = vadd.f32 %v266, %v327
      %v329 = vpop.f32.mrb[0].mxu0
      %v330 = vpop.f32.mrb[0].mxu0
      %v331 = vadd.f32 %v269, %v330
      %v332 = vpop.f32.mrb[0].mxu0
      %333 = vdwg.mxu0
      %v334 = vld [vmem:[#allocation2 + $0x2] sm:$0xff]
      %v335 = vld [vmem:[#allocation2 + $0xa] sm:$0xff]
      %v336 = vpack.c.bf16 %v335, %v334
      %s337 = scalar_lea.vmem %s1, 48
      %v338 = vld [vmem:[%s337] sm:$0xf]
      %v339 = vld [vmem:[%s337 + $0x4] sm:$0xf]
      %v340 = vld [vmem:[%s337 + $0x8] sm:$0xf]
      %v341 = vld [vmem:[%s337 + $0xc] sm:$0xf]
      %v342 = vld [vmem:[%s337 + $0x10] sm:$0xf]
      %v343 = vld [vmem:[%s337 + $0x14] sm:$0xf]
      %v350 = vunpack.c.l.b16 %v338
      %v351 = vunpack.c.l.b16 %v339
      %v352 = vunpack.c.l.b16 %v340
      %v353 = vunpack.c.l.b16 %v341
      %v354 = vunpack.c.l.b16 %v342
      %v355 = vunpack.c.l.b16 %v343
      %v356 = vpack.c.b16 %v351, %v350
      %v357 = vpack.c.b16 %v353, %v352
      %v358 = vpack.c.b16 %v355, %v354
      %v363 = vsel %vm188, %v336, 0
      %365 = vmatprep.subr.bf16.mxu0 0
      %366 = vmatpush1.bf16.msra.mxu0 %v356
      %367 = vmatprep.subr.bf16.mxu0 0
      %368 = vmatpush1.bf16.msra.mxu0 %v357
      %369 = vmatprep.subr.bf16.mxu0 0
      %370 = vmatpush1.bf16.msra.mxu0 %v358
      %371 = vmatprep.subr.bf16.mxu0 0
      %372 = vmatpush1.bf16.msra.mxu0 0
      %373 = vmatprep.subr.bf16.mxu0 0
      %374 = vmatpush1.bf16.msra.mxu0 0
      %375 = vmatprep.subr.bf16.mxu0 0
      %376 = vmatpush1.bf16.msra.mxu0 0
      %377 = vmatprep.subr.bf16.mxu0 0
      %378 = vmatpush1.bf16.msra.mxu0 0
      %379 = vmatprep.subr.bf16.mxu0 0
      %380 = vmatpush1.bf16.msra.mxu0 0
      %381 = vmatprep.subr.bf16.mxu0 0
      %382 = vmatpush1.bf16.msra.mxu0 0
      %383 = vmatprep.subr.bf16.mxu0 0
      %384 = vmatpush1.bf16.msra.mxu0 0
      %385 = vmatprep.subr.bf16.mxu0 0
      %386 = vmatpush1.bf16.msra.mxu0 0
      %387 = vmatprep.subr.bf16.mxu0 0
      %388 = vmatpush1.bf16.msra.mxu0 0
      %389 = vmatprep.subr.bf16.mxu0 0
      %390 = vmatpush1.bf16.msra.mxu0 0
      %391 = vmatprep.subr.bf16.mxu0 0
      %392 = vmatpush1.bf16.msra.mxu0 0
      %393 = vmatprep.subr.bf16.mxu0 0
      %394 = vmatpush1.bf16.msra.mxu0 0
      %395 = vmatprep.subr.bf16.mxu0 0
      %396 = vmatpush1.bf16.msra.mxu0 0
      %397 = vmatprep.mubr.bf16.mxu0 0
      %398 = vmatmul.mubr.bf16.gmra.mrb[0].mxu0 %v363
      %v399 = vpop.f32.mrb[0].mxu0
      %v400 = vadd.f32 0.0, %v399
      %v401 = vpop.f32.mrb[0].mxu0
      %v402 = vpop.f32.mrb[0].mxu0
      %v403 = vadd.f32 0.0, %v402
      %v404 = vpop.f32.mrb[0].mxu0
      %405 = vdwg.mxu0
      %v406 = vadd.f32 %v328, %v400
      %v407 = vadd.f32 %v331, %v403
      %v408 = vadd.f32 %v406, %v407
      %v409 = vrot.slane %v408, 4
      %v410 = vadd.f32 %v408, %v409
      %v411 = vrot.slane %v410, 2
      %v412 = vadd.f32 %v410, %v411
      %v413 = vrot.slane %v412, 1
      %v414 = vadd.f32 %v412, %v413
      %v415 = vmul.f32 %v406, %v406
      %v416 = vmul.f32 %v407, %v407
      %v417 = vadd.f32 %v415, %v416
      %v418 = vrot.slane %v417, 4
      %v419 = vadd.f32 %v417, %v418
      %v420 = vrot.slane %v419, 2
      %v421 = vadd.f32 %v419, %v420
      %v422 = vrot.slane %v421, 1
      %v423 = vadd.f32 %v421, %v422
      %vm424 = vcmask 1040384
      %v425 = vsel %vm424, %v414, %v423
      %426 = vst [vmem:[%s181] sm:$0x3] %v425
      %v427 = vpack.c.bf16 %v407, %v406
      %v429 = vunpack.c.l.b16 %v427
      %v430 = vunpack.c.h.b16 %v427
      %v431 = vpack.c.b16 %v429, %v429
      %v432 = vpack.c.b16 %v430, %v430
      %435 = vst [vmem:[%s177] sm:$0xf] %v431
      %436 = vst [vmem:[%s177 + $0x4] sm:$0xf] %v432
      %p437 = scmp.lt.s32.totalorder %s15, 1
      %s438 = scalar_select %p437, %s15, 1
      %s439 = smul.addr %s438, 2
      %s440 = smul.addr %s439, 4
      %s441 = scalar_lea.vmem %s2, %s440
      %p442 = scmp.lt.s32.totalorder %s15, 1
      %s443 = scalar_select %p442, %s15, 1
      %s444 = smul.addr %s443, 2
      %s445 = scalar_lea.vmem %s3, %s444
      // Predicated region
      $region29: #{conv_block_pallas.3} parent=27 // pred_check
        %p446 = pneg %p80
      $region30: #{conv_block_pallas.3} parent=27 // pred_check_branch
        %448 = sbr.rel (%p446) target = $region32
      $region31: #{conv_block_pallas.3} parent=27 // pred_region
        _
      $region32: #{conv_block_pallas.3} parent=27 // pred_fallthru
        _
      // Predicated region
      $region33: #{conv_block_pallas.3} parent=27 // pred_check
        %p449 = pneg %p106
      $region34: #{conv_block_pallas.3} parent=27 // pred_check_branch
        %451 = sbr.rel (%p449) target = $region36
      $region35: #{conv_block_pallas.3} parent=27 // pred_region
        _
      $region36: #{conv_block_pallas.3} parent=27 // pred_fallthru
        _
    $region28: #{conv_block_pallas.3} parent=5 // pred_fallthru
      _
    %p452 = scmp.le.s32.totalorder 2, %s10
    // Predicated region
    $region37: #{conv_block_pallas.3} parent=5 // pred_check
      %p453 = pneg %p452
    $region38: #{conv_block_pallas.3} parent=5 // pred_check_branch
      %455 = sbr.rel (%p453) target = $region40
    $region39: #{conv_block_pallas.3} parent=5 // pred_region
      %s456 = ssub.s32 %s10, 2
      // Predicated region
      $region41: #{conv_block_pallas.3} parent=39 // pred_check
        %p457 = pneg %p86
      $region42: #{conv_block_pallas.3} parent=39 // pred_check_branch
        %459 = sbr.rel (%p457) target = $region44
      $region43: #{conv_block_pallas.3} parent=39 // pred_region
        %p460 = scmp.lt.s32.totalorder %s16, 1
        %s461 = scalar_select %p460, %s16, 1
        %s462 = smul.addr %s461, 2
        %s463 = smul.addr %s462, 4
        %s464 = scalar_lea.vmem %s2, %s463
      $region44: #{conv_block_pallas.3} parent=39 // pred_fallthru
        _
      // Predicated region
      $region45: #{conv_block_pallas.3} parent=39 // pred_check
        %p465 = pneg %p112
      $region46: #{conv_block_pallas.3} parent=39 // pred_check_branch
        %467 = sbr.rel (%p465) target = $region48
      $region47: #{conv_block_pallas.3} parent=39 // pred_region
        %p468 = scmp.lt.s32.totalorder %s16, 1
        %s469 = scalar_select %p468, %s16, 1
        %s470 = smul.addr %s469, 2
        %s471 = scalar_lea.vmem %s3, %s470
      $region48: #{conv_block_pallas.3} parent=39 // pred_fallthru
        _
    $region40: #{conv_block_pallas.3} parent=5 // pred_fallthru
      _
  $region6: #{conv_block_pallas.3} parent=0 // loop_footer
    %s14 = sadd.s32 1, %s10
  $region7: #{conv_block_pallas.3} parent=0 // loop_footer_branch
    %9 = sbr.rel target = $region3
  $region8: #{conv_block_pallas.3} parent=0 // loop_exit
    _

// kernel: conv_block_pallas.4
$region0: #{conv_block_pallas.4}
  #allocation0 [shape = 'u32[]', space=smem, size = 0x4, offset = 0x4, fixed_abs, tag = 'smem constant byte address 0x4 - core index']
  #allocation1 [shape = 'u32[144,128]{1,0:T(1,128)}', space=vmem, size = 0x12000, scoped, tag = 'internal scratch']
  #allocation2 [shape = 'f32[18,128]{1,0:T(8,128)}', space=vmem, size = 0x3000, scoped, tag = 'scratch operand']
  %s0 = inlined_call_operand.vmem [shape: bf16[2,16,128], index: 0, kind: input, shape index: {}]
  %s1 = inlined_call_operand.vmem [shape: f32[1,128], index: 1, kind: input, shape index: {}]
  %s2 = inlined_call_operand.vmem [shape: f32[1,128], index: 2, kind: input, shape index: {}]
  %s3 = inlined_call_operand.vmem [shape: bf16[3,128,128], index: 3, kind: input, shape index: {}]
  %s4 = inlined_call_operand.vmem [shape: bf16[2,16,128], index: 4, kind: output, shape index: {0}]
  %s5 = inlined_call_operand.vmem [shape: f32[2,2,128], index: 5, kind: output, shape index: {1}]
  %6 = xla_tuple %s4, %s5
  %s7 = sld [smem:[#allocation0]]
  $region57: #{conv_block_pallas.4} parent=0
    _
  %s9 = ssub.s32 1, %s7
  %s10 = scalar_select 0, %s9, %s7
  loop: start=0, step=1, limit=4
  $region2: #{conv_block_pallas.4} parent=0 // loop_pre_header
    _
  $region3: #{conv_block_pallas.4} parent=0 // loop_header
    %s12 = sphi 0, %s16
    %p13 = scmp.ge.s32.totalorder %s12, 4
    %s22 = sphi 0, %s24
    %s25 = sphi 0, %s22
    %s26 = sphi 0, %s25
    %s42 = sphi 0, %s26
    %s46 = sphi 0, %s46
    %s48 = sphi 0, %s46
    %s49 = sphi 0, %s48
    %s63 = sphi 0, %s49
    %s67 = sphi 0, %s67
    %s69 = sphi 0, %s67
    %s70 = sphi 0, %s69
    %s84 = sphi 0, %s70
    %s88 = sphi 0, %s88
    %s90 = sphi 0, %s88
    %s91 = sphi 0, %s90
    %s105 = sphi 0, %s91
    %s111 = sphi 0, %s113
    %s114 = sphi 0, %s111
    %s115 = sphi 0, %s114
    %s131 = sphi 0, %s115
    %s137 = sphi 0, %s139
    %s140 = sphi 0, %s137
    %s141 = sphi 0, %s140
    %s157 = sphi 0, %s141
  $region4: #{conv_block_pallas.4} parent=0 // loop_header_branch
    %15 = sbr.rel (%p13) target = $region8
  $region5: #{conv_block_pallas.4} parent=0 // loop_body
    %s17 = ssub.s32 %s12, 1
    %s18 = ssub.s32 %s12, 2
    %s19 = sadd.s32 %s12, 1
    %s20 = ssub.s32 %s12, %s19
    %p21 = scmp.eq.s32.totalorder %s20, 0
    %s23 = sadd.s32 %s22, 1
    %s24 = scalar_select %p21, %s22, %s23
    %p27 = pneg %p21
    %p28 = scmp.eq.s32.totalorder %s12, 1
    %p29 = por %p27, %p28
    %p30 = scmp.ne.s32.totalorder %s22, %s25
    %p31 = scmp.eq.s32.totalorder %s12, 0
    %p32 = por %p30, %p31
    %p33 = scmp.ne.s32.totalorder %s22, %s25
    %p34 = scmp.eq.s32.totalorder %s17, 1
    %p35 = por %p33, %p34
    %p36 = scmp.ne.s32.totalorder %s25, %s26
    %p37 = scmp.eq.s32.totalorder %s17, 0
    %p38 = por %p36, %p37
    %p39 = scmp.ne.s32.totalorder %s25, %s26
    %p40 = scmp.eq.s32.totalorder %s18, 1
    %p41 = por %p39, %p40
    %p43 = scmp.ne.s32.totalorder %s26, %s42
    %p44 = scmp.eq.s32.totalorder %s18, 0
    %p45 = por %p43, %p44
    %s47 = sadd.s32 %s46, 1
    %p50 = scmp.eq.s32.totalorder %s12, 1
    %p51 = scmp.ne.s32.totalorder %s46, %s48
    %p52 = scmp.eq.s32.totalorder %s12, 0
    %p53 = por %p51, %p52
    %p54 = scmp.ne.s32.totalorder %s46, %s48
    %p55 = scmp.eq.s32.totalorder %s17, 1
    %p56 = por %p54, %p55
    %p57 = scmp.ne.s32.totalorder %s48, %s49
    %p58 = scmp.eq.s32.totalorder %s17, 0
    %p59 = por %p57, %p58
    %p60 = scmp.ne.s32.totalorder %s48, %s49
    %p61 = scmp.eq.s32.totalorder %s18, 1
    %p62 = por %p60, %p61
    %p64 = scmp.ne.s32.totalorder %s49, %s63
    %p65 = scmp.eq.s32.totalorder %s18, 0
    %p66 = por %p64, %p65
    %s68 = sadd.s32 %s67, 1
    %p71 = scmp.eq.s32.totalorder %s12, 1
    %p72 = scmp.ne.s32.totalorder %s67, %s69
    %p73 = scmp.eq.s32.totalorder %s12, 0
    %p74 = por %p72, %p73
    %p75 = scmp.ne.s32.totalorder %s67, %s69
    %p76 = scmp.eq.s32.totalorder %s17, 1
    %p77 = por %p75, %p76
    %p78 = scmp.ne.s32.totalorder %s69, %s70
    %p79 = scmp.eq.s32.totalorder %s17, 0
    %p80 = por %p78, %p79
    %p81 = scmp.ne.s32.totalorder %s69, %s70
    %p82 = scmp.eq.s32.totalorder %s18, 1
    %p83 = por %p81, %p82
    %p85 = scmp.ne.s32.totalorder %s70, %s84
    %p86 = scmp.eq.s32.totalorder %s18, 0
    %p87 = por %p85, %p86
    %s89 = sadd.s32 %s88, 1
    %p92 = scmp.eq.s32.totalorder %s12, 1
    %p93 = scmp.ne.s32.totalorder %s88, %s90
    %p94 = scmp.eq.s32.totalorder %s12, 0
    %p95 = por %p93, %p94
    %p96 = scmp.ne.s32.totalorder %s88, %s90
    %p97 = scmp.eq.s32.totalorder %s17, 1
    %p98 = por %p96, %p97
    %p99 = scmp.ne.s32.totalorder %s90, %s91
    %p100 = scmp.eq.s32.totalorder %s17, 0
    %p101 = por %p99, %p100
    %p102 = scmp.ne.s32.totalorder %s90, %s91
    %p103 = scmp.eq.s32.totalorder %s18, 1
    %p104 = por %p102, %p103
    %p106 = scmp.ne.s32.totalorder %s91, %s105
    %p107 = scmp.eq.s32.totalorder %s18, 0
    %p108 = por %p106, %p107
    %s109 = ssub.s32 %s12, %s19
    %p110 = scmp.eq.s32.totalorder %s109, 0
    %s112 = sadd.s32 %s111, 1
    %s113 = scalar_select %p110, %s111, %s112
    %p116 = pneg %p110
    %p117 = scmp.eq.s32.totalorder %s12, 1
    %p118 = por %p116, %p117
    %p119 = scmp.ne.s32.totalorder %s111, %s114
    %p120 = scmp.eq.s32.totalorder %s12, 0
    %p121 = por %p119, %p120
    %p122 = scmp.ne.s32.totalorder %s111, %s114
    %p123 = scmp.eq.s32.totalorder %s17, 1
    %p124 = por %p122, %p123
    %p125 = scmp.ne.s32.totalorder %s114, %s115
    %p126 = scmp.eq.s32.totalorder %s17, 0
    %p127 = por %p125, %p126
    %p128 = scmp.ne.s32.totalorder %s114, %s115
    %p129 = scmp.eq.s32.totalorder %s18, 1
    %p130 = por %p128, %p129
    %p132 = scmp.ne.s32.totalorder %s115, %s131
    %p133 = scmp.eq.s32.totalorder %s18, 0
    %p134 = por %p132, %p133
    %s135 = ssub.s32 %s12, %s19
    %p136 = scmp.eq.s32.totalorder %s135, 0
    %s138 = sadd.s32 %s137, 1
    %s139 = scalar_select %p136, %s137, %s138
    %p142 = pneg %p136
    %p143 = scmp.eq.s32.totalorder %s12, 1
    %p144 = por %p142, %p143
    %p145 = scmp.ne.s32.totalorder %s137, %s140
    %p146 = scmp.eq.s32.totalorder %s12, 0
    %p147 = por %p145, %p146
    %p148 = scmp.ne.s32.totalorder %s137, %s140
    %p149 = scmp.eq.s32.totalorder %s17, 1
    %p150 = por %p148, %p149
    %p151 = scmp.ne.s32.totalorder %s140, %s141
    %p152 = scmp.eq.s32.totalorder %s17, 0
    %p153 = por %p151, %p152
    %p154 = scmp.ne.s32.totalorder %s140, %s141
    %p155 = scmp.eq.s32.totalorder %s18, 1
    %p156 = por %p154, %p155
    %p158 = scmp.ne.s32.totalorder %s141, %s157
    %p159 = scmp.eq.s32.totalorder %s18, 0
    %p160 = por %p158, %p159
    %p161 = scmp.le.s32.totalorder 1, %s12
    %p162 = scmp.lt.s32.totalorder %s12, 3
    %p163 = pnand %p161, %p162
    %p164 = pneg %p163
    // Predicated region
    $region9: #{conv_block_pallas.4} parent=5 // pred_check
      _
    $region10: #{conv_block_pallas.4} parent=5 // pred_check_branch
      %166 = sbr.rel (%p163) target = $region12
    $region11: #{conv_block_pallas.4} parent=5 // pred_region
      %s167 = ssub.s32 %s12, 1
      // Predicated region
      $region13: #{conv_block_pallas.4} parent=11 // pred_check
        %p168 = pneg %p59
      $region14: #{conv_block_pallas.4} parent=11 // pred_check_branch
        %170 = sbr.rel (%p168) target = $region16
      $region15: #{conv_block_pallas.4} parent=11 // pred_region
        _
      $region16: #{conv_block_pallas.4} parent=11 // pred_fallthru
        _
      // Predicated region
      $region17: #{conv_block_pallas.4} parent=11 // pred_check
        %p171 = pneg %p80
      $region18: #{conv_block_pallas.4} parent=11 // pred_check_branch
        %173 = sbr.rel (%p171) target = $region20
      $region19: #{conv_block_pallas.4} parent=11 // pred_region
        _
      $region20: #{conv_block_pallas.4} parent=11 // pred_fallthru
        _
      // Predicated region
      $region21: #{conv_block_pallas.4} parent=11 // pred_check
        %p174 = pneg %p101
      $region22: #{conv_block_pallas.4} parent=11 // pred_check_branch
        %176 = sbr.rel (%p174) target = $region24
      $region23: #{conv_block_pallas.4} parent=11 // pred_region
        _
      $region24: #{conv_block_pallas.4} parent=11 // pred_fallthru
        _
    $region12: #{conv_block_pallas.4} parent=5 // pred_fallthru
      _
    %p177 = scmp.lt.s32.totalorder %s12, 2
    // Predicated region
    $region25: #{conv_block_pallas.4} parent=5 // pred_check
      %p178 = pneg %p177
    $region26: #{conv_block_pallas.4} parent=5 // pred_check_branch
      %180 = sbr.rel (%p178) target = $region28
    $region27: #{conv_block_pallas.4} parent=5 // pred_region
      // Predicated region
      $region29: #{conv_block_pallas.4} parent=27 // pred_check
        %p181 = pneg %p32
      $region30: #{conv_block_pallas.4} parent=27 // pred_check_branch
        %183 = sbr.rel (%p181) target = $region32
      $region31: #{conv_block_pallas.4} parent=27 // pred_region
        %p184 = scmp.lt.s32.totalorder %s12, 1
        %s185 = scalar_select %p184, %s12, 1
        %s186 = smul.addr %s185, 2
        %s187 = smul.addr %s186, 4
        %s188 = scalar_lea.vmem %s0, %s187
      $region32: #{conv_block_pallas.4} parent=27 // pred_fallthru
        _
    $region28: #{conv_block_pallas.4} parent=5 // pred_fallthru
      _
    %p189 = scmp.le.s32.totalorder 1, %s12
    %p190 = scmp.lt.s32.totalorder %s12, 3
    %p191 = pnand %p189, %p190
    %p192 = pneg %p191
    // Predicated region
    $region33: #{conv_block_pallas.4} parent=5 // pred_check
      _
    $region34: #{conv_block_pallas.4} parent=5 // pred_check_branch
      %194 = sbr.rel (%p191) target = $region36
    $region35: #{conv_block_pallas.4} parent=5 // pred_region
      %s195 = ssub.s32 %s12, 1
      %p196 = scmp.lt.s32.totalorder %s17, 1
      %s197 = scalar_select %p196, %s17, 1
      %s198 = smul.addr %s197, 2
      %s199 = smul.addr %s198, 4
      %s200 = scalar_lea.vmem %s0, %s199
      %p201 = pneg %p38
      %p202 = pneg %p35
      %p203 = pneg %p59
      %p204 = pneg %p56
      %p205 = pneg %p80
      %p206 = pneg %p77
      %p207 = pneg %p101
      %p208 = pneg %p98
      %p209 = pneg %p127
      %p210 = pneg %p124
      %p211 = scmp.lt.s32.totalorder %s17, 1
      %s212 = scalar_select %p211, %s17, 1
      %s213 = smul.addr %s212, 2
      %s214 = smul.addr %s213, 4
      %s215 = scalar_lea.vmem %s4, %s214
      %p216 = pneg %p153
      %p217 = pneg %p150
      %p218 = scmp.lt.s32.totalorder %s17, 1
      %s219 = scalar_select %p218, %s17, 1
      %s220 = smul.addr %s219, 2
      %s221 = scalar_lea.vmem %s5, %s220
      %p222 = scmp.lt.s32.totalorder %s17, 1
      %s223 = scalar_select %p222, %s17, 1
      %s224 = smul.addr %s223, 2
      %s225 = smul.addr %s224, 4
      %s226 = scalar_lea.vmem %s0, %s225
      %p227 = scmp.lt.s32.totalorder %s17, 1
      %s228 = scalar_select %p227, %s17, 1
      %s229 = smul.addr %s228, 2
      %s230 = smul.addr %s229, 4
      %s231 = scalar_lea.vmem %s4, %s230
      %p232 = scmp.lt.s32.totalorder %s17, 1
      %s233 = scalar_select %p232, %s17, 1
      %s234 = smul.addr %s233, 2
      %s235 = scalar_lea.vmem %s5, %s234
      %237 = vst [vmem:[#allocation2] sm:$0x1] 0.0
      %238 = vst [vmem:[#allocation2 + $0x11] sm:$0x1] 0.0
      %v239 = vld [vmem:[%s226] sm:$0xf]
      %v240 = vld [vmem:[%s226 + $0x4] sm:$0xf]
      %v241 = vunpack.c.l.bf16 %v239
      %v242 = vunpack.c.l.bf16 %v240
      %v243 = vld [vmem:[%s1] sm:$0x1]
      %v245 = vlaneseq
      %v246 = vshrl.u32 %v245, 7
      %v247 = vsub.s32 0, %v246
      %v248 = vrot.slane %v243, %v247
      %v250 = vmul.f32 %v241, %v248
      %v251 = vmul.f32 %v242, %v248
      %v252 = vld [vmem:[%s2] sm:$0x1]
      %v254 = vlaneseq
      %v255 = vshrl.u32 %v254, 7
      %v256 = vsub.s32 0, %v255
      %v257 = vrot.slane %v252, %v256
      %v259 = vadd.f32 %v250, %v257
      %v260 = vadd.f32 %v251, %v257
      %v261 = vmax.f32 %v259, 0.0
      %v262 = vmax.f32 %v260, 0.0
      %263 = vst [vmem:[#allocation2 + $0x1] sm:$0xff] %v261
      %264 = vst [vmem:[#allocation2 + $0x9] sm:$0xff] %v262
      %v265 = vld [vmem:[#allocation2] sm:$0xff]
      %v266 = vld [vmem:[#allocation2 + $0x8] sm:$0xff]
      %v267 = vpack.c.bf16 %v266, %v265
      %v268 = vld [vmem:[%s3] sm:$0xf]
      %v269 = vld [vmem:[%s3 + $0x4] sm:$0xf]
      %v270 = vld [vmem:[%s3 + $0x8] sm:$0xf]
      %v271 = vld [vmem:[%s3 + $0xc] sm:$0xf]
      %v272 = vld [vmem:[%s3 + $0x10] sm:$0xf]
      %v273 = vld [vmem:[%s3 + $0x14] sm:$0xf]
      %v274 = vld [vmem:[%s3 + $0x18] sm:$0xf]
      %v275 = vld [vmem:[%s3 + $0x1c] sm:$0xf]
      %v276 = vld [vmem:[%s3 + $0x20] sm:$0xf]
      %v277 = vld [vmem:[%s3 + $0x24] sm:$0xf]
      %v278 = vld [vmem:[%s3 + $0x28] sm:$0xf]
      %v279 = vld [vmem:[%s3 + $0x2c] sm:$0xf]
      %v280 = vld [vmem:[%s3 + $0x30] sm:$0xf]
      %v281 = vld [vmem:[%s3 + $0x34] sm:$0xf]
      %v282 = vld [vmem:[%s3 + $0x38] sm:$0xf]
      %v283 = vld [vmem:[%s3 + $0x3c] sm:$0xf]
      %v284 = vld [vmem:[#allocation2 + $0x1] sm:$0xff]
      %v285 = vld [vmem:[#allocation2 + $0x9] sm:$0xff]
      %v286 = vpack.c.bf16 %v285, %v284
      %s287 = scalar_lea.vmem %s3, 64
      %v288 = vld [vmem:[%s287] sm:$0xf]
      %v289 = vld [vmem:[%s287 + $0x4] sm:$0xf]
      %v290 = vld [vmem:[%s287 + $0x8] sm:$0xf]
      %v291 = vld [vmem:[%s287 + $0xc] sm:$0xf]
      %v292 = vld [vmem:[%s287 + $0x10] sm:$0xf]
      %v293 = vld [vmem:[%s287 + $0x14] sm:$0xf]
      %v294 = vld [vmem:[%s287 + $0x18] sm:$0xf]
      %v295 = vld [vmem:[%s287 + $0x1c] sm:$0xf]
      %v296 = vld [vmem:[%s287 + $0x20] sm:$0xf]
      %v297 = vld [vmem:[%s287 + $0x24] sm:$0xf]
      %v298 = vld [vmem:[%s287 + $0x28] sm:$0xf]
      %v299 = vld [vmem:[%s287 + $0x2c] sm:$0xf]
      %v300 = vld [vmem:[%s287 + $0x30] sm:$0xf]
      %v301 = vld [vmem:[%s287 + $0x34] sm:$0xf]
      %v302 = vld [vmem:[%s287 + $0x38] sm:$0xf]
      %v303 = vld [vmem:[%s287 + $0x3c] sm:$0xf]
      %v320 = vunpack.c.l.b16 %v288
      %v321 = vunpack.c.l.b16 %v289
      %v322 = vunpack.c.l.b16 %v290
      %v323 = vunpack.c.l.b16 %v291
      %v324 = vunpack.c.l.b16 %v292
      %v325 = vunpack.c.l.b16 %v293
      %v326 = vunpack.c.l.b16 %v294
      %v327 = vunpack.c.l.b16 %v295
      %v328 = vunpack.c.l.b16 %v296
      %v329 = vunpack.c.l.b16 %v297
      %v330 = vunpack.c.l.b16 %v298
      %v331 = vunpack.c.l.b16 %v299
      %v332 = vunpack.c.l.b16 %v300
      %v333 = vunpack.c.l.b16 %v301
      %v334 = vunpack.c.l.b16 %v302
      %v335 = vunpack.c.l.b16 %v303
      %v336 = vpack.c.b16 %v321, %v320
      %v337 = vpack.c.b16 %v323, %v322
      %v338 = vpack.c.b16 %v325, %v324
      %v339 = vpack.c.b16 %v327, %v326
      %v340 = vpack.c.b16 %v329, %v328
      %v341 = vpack.c.b16 %v331, %v330
      %v342 = vpack.c.b16 %v333, %v332
      %v343 = vpack.c.b16 %v335, %v334
      %352 = vmatprep.subr.bf16.mxu0 0
      %353 = vmatpush1.bf16.msra.mxu0 %v336
      %354 = vmatprep.subr.bf16.mxu0 0
      %355 = vmatpush1.bf16.msra.mxu0 %v337
      %356 = vmatprep.subr.bf16.mxu0 0
      %357 = vmatpush1.bf16.msra.mxu0 %v338
      %358 = vmatprep.subr.bf16.mxu0 0
      %359 = vmatpush1.bf16.msra.mxu0 %v339
      %360 = vmatprep.subr.bf16.mxu0 0
      %361 = vmatpush1.bf16.msra.mxu0 %v340
      %362 = vmatprep.subr.bf16.mxu0 0
      %363 = vmatpush1.bf16.msra.mxu0 %v341
      %364 = vmatprep.subr.bf16.mxu0 0
      %365 = vmatpush1.bf16.msra.mxu0 %v342
      %366 = vmatprep.subr.bf16.mxu0 0
      %367 = vmatpush1.bf16.msra.mxu0 %v343
      %368 = vmatprep.subr.bf16.mxu0 0
      %369 = vmatpush1.bf16.msra.mxu0 0
      %370 = vmatprep.subr.bf16.mxu0 0
      %371 = vmatpush1.bf16.msra.mxu0 0
      %372 = vmatprep.subr.bf16.mxu0 0
      %373 = vmatpush1.bf16.msra.mxu0 0
      %374 = vmatprep.subr.bf16.mxu0 0
      %375 = vmatpush1.bf16.msra.mxu0 0
      %376 = vmatprep.subr.bf16.mxu0 0
      %377 = vmatpush1.bf16.msra.mxu0 0
      %378 = vmatprep.subr.bf16.mxu0 0
      %379 = vmatpush1.bf16.msra.mxu0 0
      %380 = vmatprep.subr.bf16.mxu0 0
      %381 = vmatpush1.bf16.msra.mxu0 0
      %382 = vmatprep.subr.bf16.mxu0 0
      %383 = vmatpush1.bf16.msra.mxu0 0
      %384 = vmatprep.mubr.bf16.mxu0 0
      %385 = vmatmul.mubr.bf16.gmra.mrb[0].mxu0 %v286
      %v386 = vpop.f32.mrb[0].mxu0
      %v387 = vadd.f32 0.0, %v386
      %v388 = vpop.f32.mrb[0].mxu0
      %v389 = vpop.f32.mrb[0].mxu0
      %v390 = vadd.f32 0.0, %v389
      %v391 = vpop.f32.mrb[0].mxu0
      %392 = vdwg.mxu0
      %v409 = vunpack.c.l.b16 %v268
      %v410 = vunpack.c.l.b16 %v269
      %v411 = vunpack.c.l.b16 %v270
      %v412 = vunpack.c.l.b16 %v271
      %v413 = vunpack.c.l.b16 %v272
      %v414 = vunpack.c.l.b16 %v273
      %v415 = vunpack.c.l.b16 %v274
      %v416 = vunpack.c.l.b16 %v275
      %v417 = vunpack.c.l.b16 %v276
      %v418 = vunpack.c.l.b16 %v277
      %v419 = vunpack.c.l.b16 %v278
      %v420 = vunpack.c.l.b16 %v279
      %v421 = vunpack.c.l.b16 %v280
      %v422 = vunpack.c.l.b16 %v281
      %v423 = vunpack.c.l.b16 %v282
      %v424 = vunpack.c.l.b16 %v283
      %v425 = vpack.c.b16 %v410, %v409
      %v426 = vpack.c.b16 %v412, %v411
      %v427 = vpack.c.b16 %v414, %v413
      %v428 = vpack.c.b16 %v416, %v415
      %v429 = vpack.c.b16 %v418, %v417
      %v430 = vpack.c.b16 %v420, %v419
      %v431 = vpack.c.b16 %v422, %v421
      %v432 = vpack.c.b16 %v424, %v423
      %441 = vmatprep.subr.bf16.mxu0 0
      %442 = vmatpush1.bf16.msra.mxu0 %v425
      %443 = vmatprep.subr.bf16.mxu0 0
      %444 = vmatpush1.bf16.msra.mxu0 %v426
      %445 = vmatprep.subr.bf16.mxu0 0
      %446 = vmatpush1.bf16.msra.mxu0 %v427
      %447 = vmatprep.subr.bf16.mxu0 0
      %448 = vmatpush1.bf16.msra.mxu0 %v428
      %449 = vmatprep.subr.bf16.mxu0 0
      %450 = vmatpush1.bf16.msra.mxu0 %v429
      %451 = vmatprep.subr.bf16.mxu0 0
      %452 = vmatpush1.bf16.msra.mxu0 %v430
      %453 = vmatprep.subr.bf16.mxu0 0
      %454 = vmatpush1.bf16.msra.mxu0 %v431
      %455 = vmatprep.subr.bf16.mxu0 0
      %456 = vmatpush1.bf16.msra.mxu0 %v432
      %457 = vmatprep.subr.bf16.mxu0 0
      %458 = vmatpush1.bf16.msra.mxu0 0
      %459 = vmatprep.subr.bf16.mxu0 0
      %460 = vmatpush1.bf16.msra.mxu0 0
      %461 = vmatprep.subr.bf16.mxu0 0
      %462 = vmatpush1.bf16.msra.mxu0 0
      %463 = vmatprep.subr.bf16.mxu0 0
      %464 = vmatpush1.bf16.msra.mxu0 0
      %465 = vmatprep.subr.bf16.mxu0 0
      %466 = vmatpush1.bf16.msra.mxu0 0
      %467 = vmatprep.subr.bf16.mxu0 0
      %468 = vmatpush1.bf16.msra.mxu0 0
      %469 = vmatprep.subr.bf16.mxu0 0
      %470 = vmatpush1.bf16.msra.mxu0 0
      %471 = vmatprep.subr.bf16.mxu0 0
      %472 = vmatpush1.bf16.msra.mxu0 0
      %473 = vmatprep.mubr.bf16.mxu0 0
      %474 = vmatmul.mubr.bf16.gmra.mrb[0].mxu0 %v267
      %v475 = vpop.f32.mrb[0].mxu0
      %v476 = vadd.f32 %v387, %v475
      %v477 = vpop.f32.mrb[0].mxu0
      %v478 = vpop.f32.mrb[0].mxu0
      %v479 = vadd.f32 %v390, %v478
      %v480 = vpop.f32.mrb[0].mxu0
      %481 = vdwg.mxu0
      %v482 = vld [vmem:[#allocation2 + $0x2] sm:$0xff]
      %v483 = vld [vmem:[#allocation2 + $0xa] sm:$0xff]
      %v484 = vpack.c.bf16 %v483, %v482
      %s485 = scalar_lea.vmem %s3, 128
      %v486 = vld [vmem:[%s485] sm:$0xf]
      %v487 = vld [vmem:[%s485 + $0x4] sm:$0xf]
      %v488 = vld [vmem:[%s485 + $0x8] sm:$0xf]
      %v489 = vld [vmem:[%s485 + $0xc] sm:$0xf]
      %v490 = vld [vmem:[%s485 + $0x10] sm:$0xf]
      %v491 = vld [vmem:[%s485 + $0x14] sm:$0xf]
      %v492 = vld [vmem:[%s485 + $0x18] sm:$0xf]
      %v493 = vld [vmem:[%s485 + $0x1c] sm:$0xf]
      %v494 = vld [vmem:[%s485 + $0x20] sm:$0xf]
      %v495 = vld [vmem:[%s485 + $0x24] sm:$0xf]
      %v496 = vld [vmem:[%s485 + $0x28] sm:$0xf]
      %v497 = vld [vmem:[%s485 + $0x2c] sm:$0xf]
      %v498 = vld [vmem:[%s485 + $0x30] sm:$0xf]
      %v499 = vld [vmem:[%s485 + $0x34] sm:$0xf]
      %v500 = vld [vmem:[%s485 + $0x38] sm:$0xf]
      %v501 = vld [vmem:[%s485 + $0x3c] sm:$0xf]
      %v518 = vunpack.c.l.b16 %v486
      %v519 = vunpack.c.l.b16 %v487
      %v520 = vunpack.c.l.b16 %v488
      %v521 = vunpack.c.l.b16 %v489
      %v522 = vunpack.c.l.b16 %v490
      %v523 = vunpack.c.l.b16 %v491
      %v524 = vunpack.c.l.b16 %v492
      %v525 = vunpack.c.l.b16 %v493
      %v526 = vunpack.c.l.b16 %v494
      %v527 = vunpack.c.l.b16 %v495
      %v528 = vunpack.c.l.b16 %v496
      %v529 = vunpack.c.l.b16 %v497
      %v530 = vunpack.c.l.b16 %v498
      %v531 = vunpack.c.l.b16 %v499
      %v532 = vunpack.c.l.b16 %v500
      %v533 = vunpack.c.l.b16 %v501
      %v534 = vpack.c.b16 %v519, %v518
      %v535 = vpack.c.b16 %v521, %v520
      %v536 = vpack.c.b16 %v523, %v522
      %v537 = vpack.c.b16 %v525, %v524
      %v538 = vpack.c.b16 %v527, %v526
      %v539 = vpack.c.b16 %v529, %v528
      %v540 = vpack.c.b16 %v531, %v530
      %v541 = vpack.c.b16 %v533, %v532
      %550 = vmatprep.subr.bf16.mxu0 0
      %551 = vmatpush1.bf16.msra.mxu0 %v534
      %552 = vmatprep.subr.bf16.mxu0 0
      %553 = vmatpush1.bf16.msra.mxu0 %v535
      %554 = vmatprep.subr.bf16.mxu0 0
      %555 = vmatpush1.bf16.msra.mxu0 %v536
      %556 = vmatprep.subr.bf16.mxu0 0
      %557 = vmatpush1.bf16.msra.mxu0 %v537
      %558 = vmatprep.subr.bf16.mxu0 0
      %559 = vmatpush1.bf16.msra.mxu0 %v538
      %560 = vmatprep.subr.bf16.mxu0 0
      %561 = vmatpush1.bf16.msra.mxu0 %v539
      %562 = vmatprep.subr.bf16.mxu0 0
      %563 = vmatpush1.bf16.msra.mxu0 %v540
      %564 = vmatprep.subr.bf16.mxu0 0
      %565 = vmatpush1.bf16.msra.mxu0 %v541
      %566 = vmatprep.subr.bf16.mxu0 0
      %567 = vmatpush1.bf16.msra.mxu0 0
      %568 = vmatprep.subr.bf16.mxu0 0
      %569 = vmatpush1.bf16.msra.mxu0 0
      %570 = vmatprep.subr.bf16.mxu0 0
      %571 = vmatpush1.bf16.msra.mxu0 0
      %572 = vmatprep.subr.bf16.mxu0 0
      %573 = vmatpush1.bf16.msra.mxu0 0
      %574 = vmatprep.subr.bf16.mxu0 0
      %575 = vmatpush1.bf16.msra.mxu0 0
      %576 = vmatprep.subr.bf16.mxu0 0
      %577 = vmatpush1.bf16.msra.mxu0 0
      %578 = vmatprep.subr.bf16.mxu0 0
      %579 = vmatpush1.bf16.msra.mxu0 0
      %580 = vmatprep.subr.bf16.mxu0 0
      %581 = vmatpush1.bf16.msra.mxu0 0
      %582 = vmatprep.mubr.bf16.mxu0 0
      %583 = vmatmul.mubr.bf16.gmra.mrb[0].mxu0 %v484
      %v584 = vpop.f32.mrb[0].mxu0
      %v585 = vadd.f32 0.0, %v584
      %v586 = vpop.f32.mrb[0].mxu0
      %v587 = vpop.f32.mrb[0].mxu0
      %v588 = vadd.f32 0.0, %v587
      %v589 = vpop.f32.mrb[0].mxu0
      %590 = vdwg.mxu0
      %v591 = vadd.f32 %v476, %v585
      %v592 = vadd.f32 %v479, %v588
      %v593 = vadd.f32 %v591, %v592
      %v594 = vrot.slane %v593, 4
      %v595 = vadd.f32 %v593, %v594
      %v596 = vrot.slane %v595, 2
      %v597 = vadd.f32 %v595, %v596
      %v598 = vrot.slane %v597, 1
      %v599 = vadd.f32 %v597, %v598
      %v600 = vmul.f32 %v591, %v591
      %v601 = vmul.f32 %v592, %v592
      %v602 = vadd.f32 %v600, %v601
      %v603 = vrot.slane %v602, 4
      %v604 = vadd.f32 %v602, %v603
      %v605 = vrot.slane %v604, 2
      %v606 = vadd.f32 %v604, %v605
      %v607 = vrot.slane %v606, 1
      %v608 = vadd.f32 %v606, %v607
      %vm609 = vcmask 1040384
      %v610 = vsel %vm609, %v599, %v608
      %611 = vst [vmem:[%s235] sm:$0x3] %v610
      %v612 = vpack.c.bf16 %v592, %v591
      %v614 = vunpack.c.l.b16 %v612
      %v615 = vunpack.c.h.b16 %v612
      %v616 = vpack.c.b16 %v614, %v614
      %v617 = vpack.c.b16 %v615, %v615
      %620 = vst [vmem:[%s231] sm:$0xf] %v616
      %621 = vst [vmem:[%s231 + $0x4] sm:$0xf] %v617
      %p622 = scmp.lt.s32.totalorder %s17, 1
      %s623 = scalar_select %p622, %s17, 1
      %s624 = smul.addr %s623, 2
      %s625 = smul.addr %s624, 4
      %s626 = scalar_lea.vmem %s4, %s625
      %p627 = scmp.lt.s32.totalorder %s17, 1
      %s628 = scalar_select %p627, %s17, 1
      %s629 = smul.addr %s628, 2
      %s630 = scalar_lea.vmem %s5, %s629
      // Predicated region
      $region37: #{conv_block_pallas.4} parent=35 // pred_check
        %p631 = pneg %p124
      $region38: #{conv_block_pallas.4} parent=35 // pred_check_branch
        %633 = sbr.rel (%p631) target = $region40
      $region39: #{conv_block_pallas.4} parent=35 // pred_region
        _
      $region40: #{conv_block_pallas.4} parent=35 // pred_fallthru
        _
      // Predicated region
      $region41: #{conv_block_pallas.4} parent=35 // pred_check
        %p634 = pneg %p150
      $region42: #{conv_block_pallas.4} parent=35 // pred_check_branch
        %636 = sbr.rel (%p634) target = $region44
      $region43: #{conv_block_pallas.4} parent=35 // pred_region
        _
      $region44: #{conv_block_pallas.4} parent=35 // pred_fallthru
        _
    $region36: #{conv_block_pallas.4} parent=5 // pred_fallthru
      _
    %p637 = scmp.le.s32.totalorder 2, %s12
    // Predicated region
    $region45: #{conv_block_pallas.4} parent=5 // pred_check
      %p638 = pneg %p637
    $region46: #{conv_block_pallas.4} parent=5 // pred_check_branch
      %640 = sbr.rel (%p638) target = $region48
    $region47: #{conv_block_pallas.4} parent=5 // pred_region
      %s641 = ssub.s32 %s12, 2
      // Predicated region
      $region49: #{conv_block_pallas.4} parent=47 // pred_check
        %p642 = pneg %p130
      $region50: #{conv_block_pallas.4} parent=47 // pred_check_branch
        %644 = sbr.rel (%p642) target = $region52
      $region51: #{conv_block_pallas.4} parent=47 // pred_region
        %p645 = scmp.lt.s32.totalorder %s18, 1
        %s646 = scalar_select %p645, %s18, 1
        %s647 = smul.addr %s646, 2
        %s648 = smul.addr %s647, 4
        %s649 = scalar_lea.vmem %s4, %s648
      $region52: #{conv_block_pallas.4} parent=47 // pred_fallthru
        _
      // Predicated region
      $region53: #{conv_block_pallas.4} parent=47 // pred_check
        %p650 = pneg %p156
      $region54: #{conv_block_pallas.4} parent=47 // pred_check_branch
        %652 = sbr.rel (%p650) target = $region56
      $region55: #{conv_block_pallas.4} parent=47 // pred_region
        %p653 = scmp.lt.s32.totalorder %s18, 1
        %s654 = scalar_select %p653, %s18, 1
        %s655 = smul.addr %s654, 2
        %s656 = scalar_lea.vmem %s5, %s655
      $region56: #{conv_block_pallas.4} parent=47 // pred_fallthru
        _
    $region48: #{conv_block_pallas.4} parent=5 // pred_fallthru
      _
  $region6: #{conv_block_pallas.4} parent=0 // loop_footer
    %s16 = sadd.s32 1, %s12
  $region7: #{conv_block_pallas.4} parent=0 // loop_footer_branch
    %11 = sbr.rel target = $region3
  $region8: #{conv_block_pallas.4} parent=0 // loop_exit
    _

// kernel: conv_block_pallas.5
$region0: #{conv_block_pallas.5}
  #allocation0 [shape = 'u32[]', space=smem, size = 0x4, offset = 0x4, fixed_abs, tag = 'smem constant byte address 0x4 - core index']
  #allocation1 [shape = 'u32[144,128]{1,0:T(1,128)}', space=vmem, size = 0x12000, scoped, tag = 'internal scratch']
  %s0 = inlined_call_operand.vmem [shape: bf16[2,16,128], index: 0, kind: input, shape index: {}]
  %s1 = inlined_call_operand.vmem [shape: f32[1,128], index: 1, kind: input, shape index: {}]
  %s2 = inlined_call_operand.vmem [shape: f32[1,128], index: 2, kind: input, shape index: {}]
  %s3 = inlined_call_operand.vmem [shape: f32[2,16,128], index: 3, kind: output, shape index: {}]
  %s4 = sld [smem:[#allocation0]]
  $region45: #{conv_block_pallas.5} parent=0
    _
  %s6 = ssub.s32 1, %s4
  %s7 = scalar_select 0, %s6, %s4
  loop: start=0, step=1, limit=4
  $region2: #{conv_block_pallas.5} parent=0 // loop_pre_header
    _
  $region3: #{conv_block_pallas.5} parent=0 // loop_header
    %s9 = sphi 0, %s13
    %p10 = scmp.ge.s32.totalorder %s9, 4
    %s19 = sphi 0, %s21
    %s22 = sphi 0, %s19
    %s23 = sphi 0, %s22
    %s39 = sphi 0, %s23
    %s43 = sphi 0, %s43
    %s45 = sphi 0, %s43
    %s46 = sphi 0, %s45
    %s60 = sphi 0, %s46
    %s64 = sphi 0, %s64
    %s66 = sphi 0, %s64
    %s67 = sphi 0, %s66
    %s81 = sphi 0, %s67
    %s87 = sphi 0, %s89
    %s90 = sphi 0, %s87
    %s91 = sphi 0, %s90
    %s107 = sphi 0, %s91
  $region4: #{conv_block_pallas.5} parent=0 // loop_header_branch
    %12 = sbr.rel (%p10) target = $region8
  $region5: #{conv_block_pallas.5} parent=0 // loop_body
    %s14 = ssub.s32 %s9, 1
    %s15 = ssub.s32 %s9, 2
    %s16 = sadd.s32 %s9, 1
    %s17 = ssub.s32 %s9, %s16
    %p18 = scmp.eq.s32.totalorder %s17, 0
    %s20 = sadd.s32 %s19, 1
    %s21 = scalar_select %p18, %s19, %s20
    %p24 = pneg %p18
    %p25 = scmp.eq.s32.totalorder %s9, 1
    %p26 = por %p24, %p25
    %p27 = scmp.ne.s32.totalorder %s19, %s22
    %p28 = scmp.eq.s32.totalorder %s9, 0
    %p29 = por %p27, %p28
    %p30 = scmp.ne.s32.totalorder %s19, %s22
    %p31 = scmp.eq.s32.totalorder %s14, 1
    %p32 = por %p30, %p31
    %p33 = scmp.ne.s32.totalorder %s22, %s23
    %p34 = scmp.eq.s32.totalorder %s14, 0
    %p35 = por %p33, %p34
    %p36 = scmp.ne.s32.totalorder %s22, %s23
    %p37 = scmp.eq.s32.totalorder %s15, 1
    %p38 = por %p36, %p37
    %p40 = scmp.ne.s32.totalorder %s23, %s39
    %p41 = scmp.eq.s32.totalorder %s15, 0
    %p42 = por %p40, %p41
    %s44 = sadd.s32 %s43, 1
    %p47 = scmp.eq.s32.totalorder %s9, 1
    %p48 = scmp.ne.s32.totalorder %s43, %s45
    %p49 = scmp.eq.s32.totalorder %s9, 0
    %p50 = por %p48, %p49
    %p51 = scmp.ne.s32.totalorder %s43, %s45
    %p52 = scmp.eq.s32.totalorder %s14, 1
    %p53 = por %p51, %p52
    %p54 = scmp.ne.s32.totalorder %s45, %s46
    %p55 = scmp.eq.s32.totalorder %s14, 0
    %p56 = por %p54, %p55
    %p57 = scmp.ne.s32.totalorder %s45, %s46
    %p58 = scmp.eq.s32.totalorder %s15, 1
    %p59 = por %p57, %p58
    %p61 = scmp.ne.s32.totalorder %s46, %s60
    %p62 = scmp.eq.s32.totalorder %s15, 0
    %p63 = por %p61, %p62
    %s65 = sadd.s32 %s64, 1
    %p68 = scmp.eq.s32.totalorder %s9, 1
    %p69 = scmp.ne.s32.totalorder %s64, %s66
    %p70 = scmp.eq.s32.totalorder %s9, 0
    %p71 = por %p69, %p70
    %p72 = scmp.ne.s32.totalorder %s64, %s66
    %p73 = scmp.eq.s32.totalorder %s14, 1
    %p74 = por %p72, %p73
    %p75 = scmp.ne.s32.totalorder %s66, %s67
    %p76 = scmp.eq.s32.totalorder %s14, 0
    %p77 = por %p75, %p76
    %p78 = scmp.ne.s32.totalorder %s66, %s67
    %p79 = scmp.eq.s32.totalorder %s15, 1
    %p80 = por %p78, %p79
    %p82 = scmp.ne.s32.totalorder %s67, %s81
    %p83 = scmp.eq.s32.totalorder %s15, 0
    %p84 = por %p82, %p83
    %s85 = ssub.s32 %s9, %s16
    %p86 = scmp.eq.s32.totalorder %s85, 0
    %s88 = sadd.s32 %s87, 1
    %s89 = scalar_select %p86, %s87, %s88
    %p92 = pneg %p86
    %p93 = scmp.eq.s32.totalorder %s9, 1
    %p94 = por %p92, %p93
    %p95 = scmp.ne.s32.totalorder %s87, %s90
    %p96 = scmp.eq.s32.totalorder %s9, 0
    %p97 = por %p95, %p96
    %p98 = scmp.ne.s32.totalorder %s87, %s90
    %p99 = scmp.eq.s32.totalorder %s14, 1
    %p100 = por %p98, %p99
    %p101 = scmp.ne.s32.totalorder %s90, %s91
    %p102 = scmp.eq.s32.totalorder %s14, 0
    %p103 = por %p101, %p102
    %p104 = scmp.ne.s32.totalorder %s90, %s91
    %p105 = scmp.eq.s32.totalorder %s15, 1
    %p106 = por %p104, %p105
    %p108 = scmp.ne.s32.totalorder %s91, %s107
    %p109 = scmp.eq.s32.totalorder %s15, 0
    %p110 = por %p108, %p109
    %p111 = scmp.le.s32.totalorder 1, %s9
    %p112 = scmp.lt.s32.totalorder %s9, 3
    %p113 = pnand %p111, %p112
    %p114 = pneg %p113
    // Predicated region
    $region9: #{conv_block_pallas.5} parent=5 // pred_check
      _
    $region10: #{conv_block_pallas.5} parent=5 // pred_check_branch
      %116 = sbr.rel (%p113) target = $region12
    $region11: #{conv_block_pallas.5} parent=5 // pred_region
      %s117 = ssub.s32 %s9, 1
      // Predicated region
      $region13: #{conv_block_pallas.5} parent=11 // pred_check
        %p118 = pneg %p56
      $region14: #{conv_block_pallas.5} parent=11 // pred_check_branch
        %120 = sbr.rel (%p118) target = $region16
      $region15: #{conv_block_pallas.5} parent=11 // pred_region
        _
      $region16: #{conv_block_pallas.5} parent=11 // pred_fallthru
        _
      // Predicated region
      $region17: #{conv_block_pallas.5} parent=11 // pred_check
        %p121 = pneg %p77
      $region18: #{conv_block_pallas.5} parent=11 // pred_check_branch
        %123 = sbr.rel (%p121) target = $region20
      $region19: #{conv_block_pallas.5} parent=11 // pred_region
        _
      $region20: #{conv_block_pallas.5} parent=11 // pred_fallthru
        _
    $region12: #{conv_block_pallas.5} parent=5 // pred_fallthru
      _
    %p124 = scmp.lt.s32.totalorder %s9, 2
    // Predicated region
    $region21: #{conv_block_pallas.5} parent=5 // pred_check
      %p125 = pneg %p124
    $region22: #{conv_block_pallas.5} parent=5 // pred_check_branch
      %127 = sbr.rel (%p125) target = $region24
    $region23: #{conv_block_pallas.5} parent=5 // pred_region
      // Predicated region
      $region25: #{conv_block_pallas.5} parent=23 // pred_check
        %p128 = pneg %p29
      $region26: #{conv_block_pallas.5} parent=23 // pred_check_branch
        %130 = sbr.rel (%p128) target = $region28
      $region27: #{conv_block_pallas.5} parent=23 // pred_region
        %p131 = scmp.lt.s32.totalorder %s9, 1
        %s132 = scalar_select %p131, %s9, 1
        %s133 = smul.addr %s132, 2
        %s134 = smul.addr %s133, 4
        %s135 = scalar_lea.vmem %s0, %s134
      $region28: #{conv_block_pallas.5} parent=23 // pred_fallthru
        _
    $region24: #{conv_block_pallas.5} parent=5 // pred_fallthru
      _
    %p136 = scmp.le.s32.totalorder 1, %s9
    %p137 = scmp.lt.s32.totalorder %s9, 3
    %p138 = pnand %p136, %p137
    %p139 = pneg %p138
    // Predicated region
    $region29: #{conv_block_pallas.5} parent=5 // pred_check
      _
    $region30: #{conv_block_pallas.5} parent=5 // pred_check_branch
      %141 = sbr.rel (%p138) target = $region32
    $region31: #{conv_block_pallas.5} parent=5 // pred_region
      %s142 = ssub.s32 %s9, 1
      %p143 = scmp.lt.s32.totalorder %s14, 1
      %s144 = scalar_select %p143, %s14, 1
      %s145 = smul.addr %s144, 2
      %s146 = smul.addr %s145, 4
      %s147 = scalar_lea.vmem %s0, %s146
      %p148 = pneg %p35
      %p149 = pneg %p32
      %p150 = pneg %p56
      %p151 = pneg %p53
      %p152 = pneg %p77
      %p153 = pneg %p74
      %p154 = pneg %p103
      %p155 = pneg %p100
      %p156 = scmp.lt.s32.totalorder %s14, 1
      %s157 = scalar_select %p156, %s14, 1
      %s158 = smul.addr %s157, 2
      %s159 = smul.addr %s158, 8
      %s160 = scalar_lea.vmem %s3, %s159
      %p161 = scmp.lt.s32.totalorder %s14, 1
      %s162 = scalar_select %p161, %s14, 1
      %s163 = smul.addr %s162, 2
      %s164 = smul.addr %s163, 4
      %s165 = scalar_lea.vmem %s0, %s164
      %p166 = scmp.lt.s32.totalorder %s14, 1
      %s167 = scalar_select %p166, %s14, 1
      %s168 = smul.addr %s167, 2
      %s169 = smul.addr %s168, 8
      %s170 = scalar_lea.vmem %s3, %s169
      %v171 = vld [vmem:[%s165] sm:$0xf]
      %v172 = vld [vmem:[%s165 + $0x4] sm:$0xf]
      %v173 = vunpack.c.l.bf16 %v171
      %v174 = vunpack.c.l.bf16 %v172
      %v175 = vld [vmem:[%s1] sm:$0x1]
      %v177 = vlaneseq
      %v178 = vshrl.u32 %v177, 7
      %v179 = vsub.s32 0, %v178
      %v180 = vrot.slane %v175, %v179
      %v182 = vmul.f32 %v173, %v180
      %v183 = vmul.f32 %v174, %v180
      %v184 = vld [vmem:[%s2] sm:$0x1]
      %v186 = vlaneseq
      %v187 = vshrl.u32 %v186, 7
      %v188 = vsub.s32 0, %v187
      %v189 = vrot.slane %v184, %v188
      %v191 = vadd.f32 %v182, %v189
      %v192 = vadd.f32 %v183, %v189
      %v193 = vmax.f32 %v191, 0.0
      %v194 = vmax.f32 %v192, 0.0
      %195 = vst [vmem:[%s170] sm:$0xff] %v193
      %196 = vst [vmem:[%s170 + $0x8] sm:$0xff] %v194
      %p197 = scmp.lt.s32.totalorder %s14, 1
      %s198 = scalar_select %p197, %s14, 1
      %s199 = smul.addr %s198, 2
      %s200 = smul.addr %s199, 8
      %s201 = scalar_lea.vmem %s3, %s200
      // Predicated region
      $region33: #{conv_block_pallas.5} parent=31 // pred_check
        %p202 = pneg %p100
      $region34: #{conv_block_pallas.5} parent=31 // pred_check_branch
        %204 = sbr.rel (%p202) target = $region36
      $region35: #{conv_block_pallas.5} parent=31 // pred_region
        _
      $region36: #{conv_block_pallas.5} parent=31 // pred_fallthru
        _
    $region32: #{conv_block_pallas.5} parent=5 // pred_fallthru
      _
    %p205 = scmp.le.s32.totalorder 2, %s9
    // Predicated region
    $region37: #{conv_block_pallas.5} parent=5 // pred_check
      %p206 = pneg %p205
    $region38: #{conv_block_pallas.5} parent=5 // pred_check_branch
      %208 = sbr.rel (%p206) target = $region40
    $region39: #{conv_block_pallas.5} parent=5 // pred_region
      %s209 = ssub.s32 %s9, 2
      // Predicated region
      $region41: #{conv_block_pallas.5} parent=39 // pred_check
        %p210 = pneg %p106
      $region42: #{conv_block_pallas.5} parent=39 // pred_check_branch
        %212 = sbr.rel (%p210) target = $region44
      $region43: #{conv_block_pallas.5} parent=39 // pred_region
        %p213 = scmp.lt.s32.totalorder %s15, 1
        %s214 = scalar_select %p213, %s15, 1
        %s215 = smul.addr %s214, 2
        %s216 = smul.addr %s215, 8
        %s217 = scalar_lea.vmem %s3, %s216
      $region44: #{conv_block_pallas.5} parent=39 // pred_fallthru
        _
    $region40: #{conv_block_pallas.5} parent=5 // pred_fallthru
      _
  $region6: #{conv_block_pallas.5} parent=0 // loop_footer
    %s13 = sadd.s32 1, %s9
  $region7: #{conv_block_pallas.5} parent=0 // loop_footer_branch
    %8 = sbr.rel target = $region3
  $region8: #{conv_block_pallas.5} parent=0 // loop_exit
    _

</llo_original>
